<compile_context>
chip_gen: v6e
topology: v6e:2x2x1
jax: 0.10.0
libtpu: 0.0.40
codegen_flags: <defaults>
</compile_context>

<pallas_src>
import functools

import jax
import jax.numpy as jnp
import numpy as np
from jax.experimental import pallas as pl
from jax.experimental.pallas import tpu as pltpu


def _round_up(x, m):
    return ((x + m - 1) // m) * m


# ---------------------------------------------------------------------------
# Parameter construction (deterministic, mirrors module __init__)
# ---------------------------------------------------------------------------
def generate_triangular_filters(n_filters, n_freq_bins, sample_rate):
    """NumPy port of _generate_triangular_filters."""
    fb = np.zeros((n_filters, n_freq_bins), dtype=np.float32)
    f_min = 150.0
    f_max = sample_rate / 2.0
    center_freqs = np.exp(np.linspace(np.log(f_min), np.log(f_max), n_filters))
    freq_to_bin = (n_freq_bins - 1) / (sample_rate / 2.0)
    center_bins = (center_freqs * freq_to_bin).astype(np.int64)  # trunc like .long()
    center_bins = np.clip(center_bins, 1, n_freq_bins - 2)
    for i in range(n_filters):
        left = int(center_bins[i - 1]) if i > 0 else 0
        center = int(center_bins[i])
        right = int(center_bins[i + 1]) if i < n_filters - 1 else n_freq_bins - 1
        if center > left:
            fb[i, left:center] = np.linspace(0.0, 1.0, center - left)
        if right > center:
            fb[i, center:right] = np.linspace(1.0, 0.0, right - center)
    return fb


def init_filter_bank(key, n_filters, n_freq_bins, sample_rate):
    """init_strategy == 'triangular_noise'"""
    base = jnp.asarray(generate_triangular_filters(n_filters, n_freq_bins, sample_rate))
    noise = jax.random.normal(key, base.shape, dtype=jnp.float32) * 0.01
    return base + noise


# ---------------------------------------------------------------------------
# STFT constants / framing
# ---------------------------------------------------------------------------
def make_dft_matrix(n_fft, f_pad):
    """Window-folded one-sided DFT as a single [2*f_pad, n_fft] matrix.

    Rows [0, F)            -> real part  ( hann * cos )
    Rows [f_pad, f_pad+F)  -> imag part  (-hann * sin )
    Padded rows are zero and contribute nothing.
    """
    F = n_fft // 2 + 1
    n = np.arange(n_fft, dtype=np.float64)
    k = np.arange(F, dtype=np.float64)
    # torch.hann_window default is periodic: 0.5 * (1 - cos(2*pi*n/N))
    window = 0.5 * (1.0 - np.cos(2.0 * np.pi * n / n_fft))
    ang = 2.0 * np.pi * np.outer(k, n) / n_fft                 # [F, n_fft]
    dft = np.zeros((2 * f_pad, n_fft), dtype=np.float32)
    dft[:F] = window[None, :] * np.cos(ang)
    dft[f_pad:f_pad + F] = -window[None, :] * np.sin(ang)
    return jnp.asarray(dft)


def frame_waveform_transposed(waveform, n_fft, hop_length, t_pad):
    """center=True reflect padding + framing, in the transposed layout
    [B, n_fft, T_pad] (frame index on the lane axis).

    Built from contiguous shifted reshapes + small transposes (no gather).
    Frames with index >= T see appended zeros and are sliced away later.
    """
    if waveform.ndim == 1:
        waveform = waveform[None, :]
    B = waveform.shape[0]
    pad = n_fft // 2
    padded = jnp.pad(waveform, ((0, 0), (pad, pad)), mode="reflect")
    l_ext = t_pad * hop_length + n_fft
    padded = jnp.pad(padded, ((0, 0), (0, l_ext - padded.shape[1])))
    if n_fft % hop_length == 0:
        chunks = padded.reshape(B, l_ext // hop_length, hop_length)
        pieces = [jnp.swapaxes(chunks[:, j:j + t_pad, :], 1, 2)
                  for j in range(n_fft // hop_length)]
        return jnp.concatenate(pieces, axis=1)                  # [B, n_fft, T_pad]
    # Fallback (hop does not divide n_fft): gather.
    idx = jnp.arange(n_fft)[:, None] + jnp.arange(t_pad)[None, :] * hop_length
    return padded[:, idx]                                       # [B, n_fft, T_pad]


# ---------------------------------------------------------------------------
# Pallas kernel: combined DFT matmul + magnitude + filter-bank matmul
# ---------------------------------------------------------------------------
def _filterbank_kernel(frames_ref, dft_ref, fb_ref, out_ref, *, f_pad):
    x = frames_ref[0]                                           # [n_fft, tT] (bf16)
    # One MXU stream: [2*F_pad, n_fft] @ [n_fft, tT] -> [2*F_pad, tT] (f32 acc)
    ri = jnp.dot(dft_ref[...], x, preferred_element_type=jnp.float32)
    re = ri[:f_pad]                                             # [F_pad, tT]
    im = ri[f_pad:]                                             # [F_pad, tT]
    # NOTE: no eps inside sqrt -- matches torch.abs() forward exactly.
    # (If this kernel is ever differentiated, add an eps: grad at |z|=0 is inf.)
    mag = jnp.sqrt(re * re + im * im)                           # f32
    # [n_filters, F_pad] @ [F_pad, tT] -> [n_filters, tT], lane-dense store.
    out_ref[0] = jnp.dot(fb_ref[...], mag.astype(fb_ref.dtype),
                         preferred_element_type=jnp.float32).astype(out_ref.dtype)


def fully_learnable_filterbank_forward(waveform, filter_bank, *, n_fft, hop_length,
                                       t_tile=512, compute_dtype=jnp.bfloat16):
    """Returns [B, n_filters, T] exactly like the PyTorch module (T = 1 + time // hop)."""
    if waveform.ndim == 1:
        waveform = waveform[None, :]
    B, n_samples = waveform.shape
    n_filters, n_freq_bins = filter_bank.shape
    F = n_fft // 2 + 1
    assert n_freq_bins == F, (n_freq_bins, F)

    T = 1 + n_samples // hop_length
    tT = int(t_tile)
    assert tT % 128 == 0, "t_tile must be a multiple of 128 (lane width)"
    t_pad = _round_up(T, tT)
    f_pad = _round_up(F, 8)

    frames_t = frame_waveform_transposed(
        waveform.astype(jnp.float32), n_fft, hop_length, t_pad).astype(compute_dtype)
    dft = make_dft_matrix(n_fft, f_pad).astype(compute_dtype)          # [2*F_pad, n_fft]
    fb_pad = jnp.zeros((n_filters, f_pad), jnp.float32)
    fb_pad = fb_pad.at[:, :F].set(filter_bank.astype(jnp.float32)).astype(compute_dtype)

    kernel = functools.partial(_filterbank_kernel, f_pad=f_pad)

    out = pl.pallas_call(
        kernel,
        out_shape=jax.ShapeDtypeStruct((B, n_filters, t_pad), jnp.float32),
        grid_spec=pltpu.PrefetchScalarGridSpec(
            num_scalar_prefetch=0,
            grid=(B, t_pad // tT),
            in_specs=[
                pl.BlockSpec((1, n_fft, tT), lambda b, t: (b, 0, t)),
                pl.BlockSpec((2 * f_pad, n_fft), lambda b, t: (0, 0)),
                pl.BlockSpec((n_filters, f_pad), lambda b, t: (0, 0)),
            ],
            out_specs=pl.BlockSpec((1, n_filters, tT), lambda b, t: (b, 0, t)),
        ),
        compiler_params=pltpu.CompilerParams(
            dimension_semantics=("parallel", "parallel"),
            vmem_limit_bytes=32 * 1024 * 1024,
        ),
    )(frames_t, dft, fb_pad)

    return out[:, :, :T]                                        # [B, n_filters, T]


# ---------------------------------------------------------------------------
# Pure-JAX reference (for sanity check). compute_dtype selects the matmul
# precision: f32 = exact module semantics, bf16 = same path as the kernel.
# ---------------------------------------------------------------------------
def reference_forward(waveform, filter_bank, *, n_fft, hop_length,
                      compute_dtype=jnp.float32):
    if waveform.ndim == 1:
        waveform = waveform[None, :]
    pad = n_fft // 2
    padded = jnp.pad(waveform.astype(jnp.float32), ((0, 0), (pad, pad)), mode="reflect")
    T = 1 + waveform.shape[1] // hop_length
    idx = jnp.arange(T)[:, None] * hop_length + jnp.arange(n_fft)[None, :]
    frames = padded[:, idx]                                     # [B, T, n_fft]

    F = n_fft // 2 + 1
    n = np.arange(n_fft, dtype=np.float64)
    k = np.arange(F, dtype=np.float64)
    window = 0.5 * (1.0 - np.cos(2.0 * np.pi * n / n_fft))
    ang = 2.0 * np.pi * np.outer(n, k) / n_fft                  # [n_fft, F]
    cw = jnp.asarray((window[:, None] * np.cos(ang)).astype(np.float32))
    sw = jnp.asarray((-window[:, None] * np.sin(ang)).astype(np.float32))

    fr = frames.astype(compute_dtype)
    re = jnp.einsum("btn,nf->btf", fr, cw.astype(compute_dtype),
                    preferred_element_type=jnp.float32)
    im = jnp.einsum("btn,nf->btf", fr, sw.astype(compute_dtype),
                    preferred_element_type=jnp.float32)
    mag = jnp.sqrt(re * re + im * im)                           # [B, T, F] f32
    return jnp.einsum("nf,btf->bnt", filter_bank.astype(compute_dtype),
                      mag.astype(compute_dtype), preferred_element_type=jnp.float32)


if __name__ == "__main__":
    # Module-level constants from the spec: n_fft=512, hop=128, n_filters=40
    n_fft = 512
    hop_length = 128
    n_filters = 40
    n_freq_bins = n_fft // 2 + 1          # 257
    sample_rate = 32000
    batch = 2
    n_samples = 48000                     # -> T = 1 + 48000 // 128 = 376 frames

    key = jax.random.PRNGKey(0)
    k_fb, k_wav = jax.random.split(key)

    filter_bank = init_filter_bank(k_fb, n_filters, n_freq_bins, sample_rate)
    waveform = jax.random.normal(k_wav, (batch, n_samples), dtype=jnp.float32)

    # t_tile=128 so the small test exercises several T tiles (grid = (2, 3)).
    out = fully_learnable_filterbank_forward(
        waveform, filter_bank, n_fft=n_fft, hop_length=hop_length, t_tile=128)
    out = jax.block_until_ready(out)

    T = 1 + n_samples // hop_length
    assert out.shape == (batch, n_filters, T), out.shape
    out_np = np.asarray(out, dtype=np.float64)

    # (1) Tight check against a reference taking the same bf16-MXU path.
    ref_bf16 = np.asarray(reference_forward(
        waveform, filter_bank, n_fft=n_fft, hop_length=hop_length,
        compute_dtype=jnp.bfloat16), dtype=np.float64)
    np.testing.assert_allclose(out_np, ref_bf16, rtol=5e-3, atol=5e-3)

    # (2) Norm-wise check against exact f32 module semantics (bf16 MXU inputs).
    ref_f32 = np.asarray(reference_forward(
        waveform, filter_bank, n_fft=n_fft, hop_length=hop_length,
        compute_dtype=jnp.float32), dtype=np.float64)
    rel = np.linalg.norm(out_np - ref_f32) / np.linalg.norm(ref_f32)
    assert rel < 2e-2, f"relative error vs f32 reference too large: {rel}"

    print("KERNEL_OK")
</pallas_src>

<mosaic_0001>
module attributes {stable_mosaic.version = 11 : i64} {
  func.func @_filterbank_kernel(%arg0: i32, %arg1: i32, %arg2: memref<1x512x128xbf16, #tpu.memory_space<vmem>>, %arg3: memref<528x512xbf16, #tpu.memory_space<vmem>>, %arg4: memref<40x264xbf16, #tpu.memory_space<vmem>>, %arg5: memref<1x40x128xf32, #tpu.memory_space<vmem>>) attributes {dimension_semantics = [#tpu.dimension_semantics<parallel>, #tpu.dimension_semantics<parallel>], iteration_bounds = array<i64: 2, 3>, scalar_prefetch = 0 : i64, scratch_operands = 0 : i64, tpu.core_type = #tpu.core_type<tc>, window_params = [{transform_indices = @transform_0, window_bounds = array<i64: 1, 512, 128>}, {pipeline_mode = #tpu.pipeline_mode<synchronous>, transform_indices = @transform_1, window_bounds = array<i64: 528, 512>}, {pipeline_mode = #tpu.pipeline_mode<synchronous>, transform_indices = @transform_2, window_bounds = array<i64: 40, 264>}, {transform_indices = @transform_3, window_bounds = array<i64: 1, 40, 128>}]} {
    %c0 = arith.constant 0 : index
    %c0_0 = arith.constant 0 : index
    %c0_1 = arith.constant 0 : index
    %0 = vector.load %arg2[%c0, %c0_0, %c0_1] : memref<1x512x128xbf16, #tpu.memory_space<vmem>>, vector<1x512x128xbf16>
    %1 = vector.shape_cast %0 : vector<1x512x128xbf16> to vector<512x128xbf16>
    %c0_2 = arith.constant 0 : index
    %c0_3 = arith.constant 0 : index
    %2 = vector.load %arg3[%c0_2, %c0_3] : memref<528x512xbf16, #tpu.memory_space<vmem>>, vector<528x512xbf16>
    %cst = arith.constant dense<0.000000e+00> : vector<528x128xf32>
    %3 = tpu.matmul %2, %1, %cst {dimension_numbers = #tpu.dot_dimension_numbers<[1], [0], [0], [1], [0, 0, 1, 1], [], []>} : vector<528x512xbf16>, vector<512x128xbf16>, vector<528x128xf32> -> vector<528x128xf32>
    %4 = vector.extract_strided_slice %3 {offsets = [0, 0], sizes = [264, 128], strides = [1, 1]} : vector<528x128xf32> to vector<264x128xf32>
    %5 = vector.extract_strided_slice %3 {offsets = [264, 0], sizes = [264, 128], strides = [1, 1]} : vector<528x128xf32> to vector<264x128xf32>
    %6 = arith.mulf %4, %4 : vector<264x128xf32>
    %7 = arith.mulf %5, %5 : vector<264x128xf32>
    %8 = arith.addf %6, %7 : vector<264x128xf32>
    %9 = math.sqrt %8 : vector<264x128xf32>
    %c0_4 = arith.constant 0 : index
    %c0_5 = arith.constant 0 : index
    %10 = vector.load %arg4[%c0_4, %c0_5] : memref<40x264xbf16, #tpu.memory_space<vmem>>, vector<40x264xbf16>
    %11 = arith.truncf %9 : vector<264x128xf32> to vector<264x128xbf16>
    %cst_6 = arith.constant dense<0.000000e+00> : vector<40x128xf32>
    %12 = tpu.matmul %10, %11, %cst_6 {dimension_numbers = #tpu.dot_dimension_numbers<[1], [0], [0], [1], [0, 0, 1, 1], [], []>} : vector<40x264xbf16>, vector<264x128xbf16>, vector<40x128xf32> -> vector<40x128xf32>
    %c0_7 = arith.constant 0 : index
    %c0_8 = arith.constant 0 : index
    %c0_9 = arith.constant 0 : index
    %13 = vector.load %arg5[%c0_7, %c0_8, %c0_9] : memref<1x40x128xf32, #tpu.memory_space<vmem>>, vector<1x40x128xf32>
    %14 = vector.shape_cast %13 : vector<1x40x128xf32> to vector<40x128xf32>
    %15 = vector.shape_cast %12 : vector<40x128xf32> to vector<1x40x128xf32>
    tpu.vector_store %arg5[%c0_7, %c0_8, %c0_9], %15 {strides = array<i32>} : memref<1x40x128xf32, #tpu.memory_space<vmem>>, vector<1x40x128xf32>,
    return
  }
  func.func @transform_0(%arg0: i32, %arg1: i32) -> (i32, i32, i32) {
    %c0_i32 = arith.constant 0 : i32
    %c0_i32_0 = arith.constant 0 : i32
    return %arg0, %c0_i32, %arg1 : i32, i32, i32
  }
  func.func @transform_1(%arg0: i32, %arg1: i32) -> (i32, i32) {
    %c0_i32 = arith.constant 0 : i32
    %c0_i32_0 = arith.constant 0 : i32
    %c0_i32_1 = arith.constant 0 : i32
    return %c0_i32, %c0_i32_0 : i32, i32
  }
  func.func @transform_2(%arg0: i32, %arg1: i32) -> (i32, i32) {
    %c0_i32 = arith.constant 0 : i32
    %c0_i32_0 = arith.constant 0 : i32
    %c0_i32_1 = arith.constant 0 : i32
    return %c0_i32, %c0_i32_0 : i32, i32
  }
  func.func @transform_3(%arg0: i32, %arg1: i32) -> (i32, i32, i32) {
    %c0_i32 = arith.constant 0 : i32
    %c0_i32_0 = arith.constant 0 : i32
    return %arg0, %c0_i32, %arg1 : i32, i32, i32
  }
}

</mosaic_0001>

<llo_original>
// kernel: tpu_custom_call.1
$region0: #{tpu_custom_call.1}
  #allocation0 [shape = 'u32[]', space=smem, size = 0x4, offset = 0x4, fixed_abs, tag = 'smem constant byte address 0x4 - core index']
  #allocation1 [shape = 'u32[144,128]{1,0:T(1,128)}', space=vmem, size = 0x12000, scoped, tag = 'internal scratch']
  %s0 = inlined_call_operand.hbm [shape: bf16[2,512,384], index: 0, kind: input, shape index: {}]
  %s1 = inlined_call_operand.hbm [shape: bf16[528,512], index: 1, kind: input, shape index: {}]
  %s2 = inlined_call_operand.hbm [shape: bf16[40,264], index: 2, kind: input, shape index: {}]
  %s3 = inlined_call_operand.hbm [shape: f32[2,40,384], index: 3, kind: output, shape index: {}]
  %s4 = sld [smem:[#allocation0]]
  $region57: #{tpu_custom_call.1} parent=0
    _
  %s6 = ssub.s32 1, %s4
  %s7 = scalar_select 0, %s6, %s4
  $region1: #{tpu_custom_call.1} parent=0
    #allocation2 [shape = 'u8[262144]{0}', space=vmem, size = 0x40000, scoped, tag = 'input window, operand 0']
    #allocation3 [shape = 's32[2]{0}', space=sflag, size = 0x8, scoped, tag = 'scoped memory for tpu_custom_call.1']
    #allocation4 [shape = 's32[2]{0}', space=sflag, size = 0x8, scoped, tag = 'scoped memory for tpu_custom_call.1']
    #allocation5 [shape = 'u8[540672]{0}', space=vmem, size = 0x84000, scoped, tag = 'input window, operand 1, single buffered']
    #allocation6 [shape = 's32[1]{0}', space=sflag, size = 0x4, scoped, tag = 'scoped memory for tpu_custom_call.1']
    #allocation7 [shape = 'u8[30720]{0}', space=vmem, size = 0x7800, scoped, tag = 'input window, operand 2, single buffered']
    #allocation8 [shape = 'u8[40960]{0}', space=vmem, size = 0xa000, scoped, tag = 'output window, operand 0']
    %8 = vsyncpa [#allocation3], 0
    %s9 = scalar_lea.sflag [#allocation3], 1
    %10 = vsyncpa %s9, 0
    %11 = vsyncpa [#allocation6], 0
    %12 = vsyncpa [#allocation4], 0
    %s13 = scalar_lea.sflag [#allocation4], 1
    %14 = vsyncpa %s13, 0
    loop: start=0, step=1, limit=8
    $region2: #{tpu_custom_call.1} parent=1 // loop_pre_header
      _
    $region3: #{tpu_custom_call.1} parent=1 // loop_header
      %s16 = sphi 0, %s20
      %p17 = scmp.ge.s32.totalorder %s16, 8
      %s23 = sphi 0, %s35
      %s24 = sphi 0, %s31
      %s25 = sphi 0, %s23
      %s26 = sphi 0, %s24
      %s27 = sphi 0, %s25
      %s28 = sphi 0, %s26
      %s40 = sphi 0, %s42
      %s43 = sphi 0, %s40
      %s44 = sphi 0, %s43
      %s60 = sphi 0, %s44
      %s64 = sphi 0, %s64
      %s66 = sphi 0, %s64
      %s67 = sphi 0, %s66
      %s81 = sphi 0, %s67
      %s85 = sphi 0, %s85
      %s87 = sphi 0, %s85
      %s88 = sphi 0, %s87
      %s102 = sphi 0, %s88
      %s110 = sphi 0, %s112
      %s113 = sphi 0, %s110
      %s114 = sphi 0, %s113
      %s130 = sphi 0, %s114
    $region4: #{tpu_custom_call.1} parent=1 // loop_header_branch
      %19 = sbr.rel (%p17) target = $region8
    $region5: #{tpu_custom_call.1} parent=1 // loop_body
      %s21 = ssub.s32 %s16, 1
      %s22 = ssub.s32 %s16, 2
      %s29 = sadd.s32 1, %s24
      %p30 = scmp.ge.s32.totalorder %s29, 3
      %s31 = scalar_select %p30, 0, %s29
      %s32 = sadd.s32 1, %s23
      %s33 = scalar_select %p30, %s32, %s23
      %p34 = scmp.ge.s32.totalorder %s33, 2
      %s35 = scalar_select %p34, 0, %s33
      %s36 = ssub.s32 %s23, %s35
      %s37 = ssub.s32 %s24, %s31
      %s38 = sor.u32 %s36, %s37
      %p39 = scmp.eq.s32.totalorder %s38, 0
      %s41 = sadd.s32 %s40, 1
      %s42 = scalar_select %p39, %s40, %s41
      %p45 = pneg %p39
      %p46 = scmp.eq.s32.totalorder %s16, 5
      %p47 = por %p45, %p46
      %p48 = scmp.ne.s32.totalorder %s40, %s43
      %p49 = scmp.eq.s32.totalorder %s16, 0
      %p50 = por %p48, %p49
      %p51 = scmp.ne.s32.totalorder %s40, %s43
      %p52 = scmp.eq.s32.totalorder %s21, 5
      %p53 = por %p51, %p52
      %p54 = scmp.ne.s32.totalorder %s43, %s44
      %p55 = scmp.eq.s32.totalorder %s21, 0
      %p56 = por %p54, %p55
      %p57 = scmp.ne.s32.totalorder %s43, %s44
      %p58 = scmp.eq.s32.totalorder %s22, 5
      %p59 = por %p57, %p58
      %p61 = scmp.ne.s32.totalorder %s44, %s60
      %p62 = scmp.eq.s32.totalorder %s22, 0
      %p63 = por %p61, %p62
      %s65 = sadd.s32 %s64, 1
      %p68 = scmp.eq.s32.totalorder %s16, 5
      %p69 = scmp.ne.s32.totalorder %s64, %s66
      %p70 = scmp.eq.s32.totalorder %s16, 0
      %p71 = por %p69, %p70
      %p72 = scmp.ne.s32.totalorder %s64, %s66
      %p73 = scmp.eq.s32.totalorder %s21, 5
      %p74 = por %p72, %p73
      %p75 = scmp.ne.s32.totalorder %s66, %s67
      %p76 = scmp.eq.s32.totalorder %s21, 0
      %p77 = por %p75, %p76
      %p78 = scmp.ne.s32.totalorder %s66, %s67
      %p79 = scmp.eq.s32.totalorder %s22, 5
      %p80 = por %p78, %p79
      %p82 = scmp.ne.s32.totalorder %s67, %s81
      %p83 = scmp.eq.s32.totalorder %s22, 0
      %p84 = por %p82, %p83
      %s86 = sadd.s32 %s85, 1
      %p89 = scmp.eq.s32.totalorder %s16, 5
      %p90 = scmp.ne.s32.totalorder %s85, %s87
      %p91 = scmp.eq.s32.totalorder %s16, 0
      %p92 = por %p90, %p91
      %p93 = scmp.ne.s32.totalorder %s85, %s87
      %p94 = scmp.eq.s32.totalorder %s21, 5
      %p95 = por %p93, %p94
      %p96 = scmp.ne.s32.totalorder %s87, %s88
      %p97 = scmp.eq.s32.totalorder %s21, 0
      %p98 = por %p96, %p97
      %p99 = scmp.ne.s32.totalorder %s87, %s88
      %p100 = scmp.eq.s32.totalorder %s22, 5
      %p101 = por %p99, %p100
      %p103 = scmp.ne.s32.totalorder %s88, %s102
      %p104 = scmp.eq.s32.totalorder %s22, 0
      %p105 = por %p103, %p104
      %s106 = ssub.s32 %s23, %s35
      %s107 = ssub.s32 %s24, %s31
      %s108 = sor.u32 %s106, %s107
      %p109 = scmp.eq.s32.totalorder %s108, 0
      %s111 = sadd.s32 %s110, 1
      %s112 = scalar_select %p109, %s110, %s111
      %p115 = pneg %p109
      %p116 = scmp.eq.s32.totalorder %s16, 5
      %p117 = por %p115, %p116
      %p118 = scmp.ne.s32.totalorder %s110, %s113
      %p119 = scmp.eq.s32.totalorder %s16, 0
      %p120 = por %p118, %p119
      %p121 = scmp.ne.s32.totalorder %s110, %s113
      %p122 = scmp.eq.s32.totalorder %s21, 5
      %p123 = por %p121, %p122
      %p124 = scmp.ne.s32.totalorder %s113, %s114
      %p125 = scmp.eq.s32.totalorder %s21, 0
      %p126 = por %p124, %p125
      %p127 = scmp.ne.s32.totalorder %s113, %s114
      %p128 = scmp.eq.s32.totalorder %s22, 5
      %p129 = por %p127, %p128
      %p131 = scmp.ne.s32.totalorder %s114, %s130
      %p132 = scmp.eq.s32.totalorder %s22, 0
      %p133 = por %p131, %p132
      %p134 = scmp.le.s32.totalorder 1, %s16
      %p135 = scmp.lt.s32.totalorder %s16, 7
      %p136 = pnand %p134, %p135
      %p137 = pneg %p136
      // Predicated region
      $region9: #{tpu_custom_call.1} parent=5 // pred_check
        _
      $region10: #{tpu_custom_call.1} parent=5 // pred_check_branch
        %139 = sbr.rel (%p136) target = $region12
      $region11: #{tpu_custom_call.1} parent=5 // pred_region
        %s140 = ssub.s32 %s16, 1
        // Predicated region
        $region13: #{tpu_custom_call.1} parent=11 // pred_check
          %p141 = pneg %p77
        $region14: #{tpu_custom_call.1} parent=11 // pred_check_branch
          %143 = sbr.rel (%p141) target = $region16
        $region15: #{tpu_custom_call.1} parent=11 // pred_region
          %s145 = ssub.s32 16896, 16896
          %146 = vsyncadd [#allocation6], %s145
          %s147 = sshll.u32 [#allocation5], 4
          %s148 = int_to_ptr.vmem [resolvable:$true] %s147
          %153 = dma.hbm_to_vmem [thread:$0]  %s1, 16896, %s148, [#allocation6], 256, 256, 16
        $region16: #{tpu_custom_call.1} parent=11 // pred_fallthru
          _
        // Predicated region
        $region17: #{tpu_custom_call.1} parent=11 // pred_check
          %p154 = pneg %p98
        $region18: #{tpu_custom_call.1} parent=11 // pred_check_branch
          %156 = sbr.rel (%p154) target = $region20
        $region19: #{tpu_custom_call.1} parent=11 // pred_region
          %s158 = ssub.s32 960, 960
          %159 = vsyncadd [#allocation6], %s158
          %s160 = sshll.u32 [#allocation7], 4
          %s161 = int_to_ptr.vmem [resolvable:$true] %s160
          %166 = dma.hbm_to_vmem [thread:$0]  %s2, 960, %s161, [#allocation6], 192, 192, 12
        $region20: #{tpu_custom_call.1} parent=11 // pred_fallthru
          _
      $region12: #{tpu_custom_call.1} parent=5 // pred_fallthru
        _
      %p167 = scmp.lt.s32.totalorder %s16, 6
      // Predicated region
      $region21: #{tpu_custom_call.1} parent=5 // pred_check
        %p168 = pneg %p167
      $region22: #{tpu_custom_call.1} parent=5 // pred_check_branch
        %170 = sbr.rel (%p168) target = $region24
      $region23: #{tpu_custom_call.1} parent=5 // pred_region
        // Predicated region
        $region25: #{tpu_custom_call.1} parent=23 // pred_check
          %p171 = pneg %p50
        $region26: #{tpu_custom_call.1} parent=23 // pred_check_branch
          %173 = sbr.rel (%p171) target = $region28
        $region27: #{tpu_custom_call.1} parent=23 // pred_region
          %s174 = sand.u32 %s40, 1
          %s175 = scalar_lea.sflag [#allocation3], %s174
          %s176 = sand.u32 %s40, 1
          %s177 = smul.addr %s176, 256
          %s178 = scalar_lea.vmem [#allocation2], %s177
          %s180 = ssub.s32 4096, 4096
          %181 = vsyncadd %s175, %s180
          %s182 = smul.addr %s23, 192
          %s183 = sadd.s32 %s24, %s182
          %s184 = smul.addr %s183, 64
          %s185 = scalar_lea.hbm %s0, %s184
          %s186 = sshll.u32 %s178, 4
          %s187 = int_to_ptr.vmem [resolvable:$true] %s186
          %192 = dma.hbm_to_vmem [thread:$0]  %s185, 4096, %s187, %s175, 192, 64, 4
        $region28: #{tpu_custom_call.1} parent=23 // pred_fallthru
          _
      $region24: #{tpu_custom_call.1} parent=5 // pred_fallthru
        _
      %p193 = scmp.le.s32.totalorder 1, %s16
      %p194 = scmp.lt.s32.totalorder %s16, 7
      %p195 = pnand %p193, %p194
      %p196 = pneg %p195
      // Predicated region
      $region29: #{tpu_custom_call.1} parent=5 // pred_check
        _
      $region30: #{tpu_custom_call.1} parent=5 // pred_check_branch
        %198 = sbr.rel (%p195) target = $region32
      $region31: #{tpu_custom_call.1} parent=5 // pred_region
        %s199 = ssub.s32 %s16, 1
        %s200 = sand.u32 %s43, 1
        %s201 = scalar_lea.sflag [#allocation3], %s200
        %s202 = sand.u32 %s43, 1
        %s203 = smul.addr %s202, 256
        %s204 = scalar_lea.vmem [#allocation2], %s203
        // Predicated region
        $region33: #{tpu_custom_call.1} parent=31 // pred_check
          %p205 = pneg %p56
        $region34: #{tpu_custom_call.1} parent=31 // pred_check_branch
          %207 = sbr.rel (%p205) target = $region36
        $region35: #{tpu_custom_call.1} parent=31 // pred_region
          %208 = dma.done %s201, 4096
        $region36: #{tpu_custom_call.1} parent=31 // pred_fallthru
          _
        // Predicated region
        $region37: #{tpu_custom_call.1} parent=31 // pred_check
          %p209 = pneg %p77
        $region38: #{tpu_custom_call.1} parent=31 // pred_check_branch
          %211 = sbr.rel (%p209) target = $region40
        $region39: #{tpu_custom_call.1} parent=31 // pred_region
          %212 = dma.done [#allocation6], 16896
        $region40: #{tpu_custom_call.1} parent=31 // pred_fallthru
          _
        // Predicated region
        $region41: #{tpu_custom_call.1} parent=31 // pred_check
          %p213 = pneg %p98
        $region42: #{tpu_custom_call.1} parent=31 // pred_check_branch
          %215 = sbr.rel (%p213) target = $region44
        $region43: #{tpu_custom_call.1} parent=31 // pred_region
          %216 = dma.done [#allocation6], 960
        $region44: #{tpu_custom_call.1} parent=31 // pred_fallthru
          _
        %s217 = sand.u32 %s43, 1
        %s218 = scalar_lea.sflag [#allocation3], %s217
        %s219 = sand.u32 %s43, 1
        %s220 = smul.addr %s219, 256
        %s221 = scalar_lea.vmem [#allocation2], %s220
        %p222 = pneg %p56
        %p223 = pneg %p53
        %p224 = pneg %p77
        %p225 = pneg %p74
        %p226 = pneg %p98
        %p227 = pneg %p95
        %p228 = pneg %p126
        %p229 = pneg %p123
        %s230 = sand.u32 %s113, 1
        %s231 = scalar_lea.sflag [#allocation4], %s230
        %s232 = sand.u32 %s113, 1
        %s233 = smul.addr %s232, 40
        %s234 = scalar_lea.vmem [#allocation8], %s233
        %v236 = vld [vmem:[%s204] sm:$0xf]
        %v237 = vld [vmem:[%s204 + $0x4] sm:$0xf]
        %v238 = vld [vmem:[%s204 + $0x8] sm:$0xf]
        %v239 = vld [vmem:[%s204 + $0xc] sm:$0xf]
        %v240 = vld [vmem:[%s204 + $0x10] sm:$0xf]
        %v241 = vld [vmem:[%s204 + $0x14] sm:$0xf]
        %v242 = vld [vmem:[%s204 + $0x18] sm:$0xf]
        %v243 = vld [vmem:[%s204 + $0x1c] sm:$0xf]
        %v244 = vld [vmem:[%s204 + $0x20] sm:$0xf]
        %v245 = vld [vmem:[%s204 + $0x24] sm:$0xf]
        %v246 = vld [vmem:[%s204 + $0x28] sm:$0xf]
        %v247 = vld [vmem:[%s204 + $0x2c] sm:$0xf]
        %v248 = vld [vmem:[%s204 + $0x30] sm:$0xf]
        %v249 = vld [vmem:[%s204 + $0x34] sm:$0xf]
        %v250 = vld [vmem:[%s204 + $0x38] sm:$0xf]
        %v251 = vld [vmem:[%s204 + $0x3c] sm:$0xf]
        %v252 = vld [vmem:[%s204 + $0x40] sm:$0xf]
        %v253 = vld [vmem:[%s204 + $0x44] sm:$0xf]
        %v254 = vld [vmem:[%s204 + $0x48] sm:$0xf]
        %v255 = vld [vmem:[%s204 + $0x4c] sm:$0xf]
        %v256 = vld [vmem:[%s204 + $0x50] sm:$0xf]
        %v257 = vld [vmem:[%s204 + $0x54] sm:$0xf]
        %v258 = vld [vmem:[%s204 + $0x58] sm:$0xf]
        %v259 = vld [vmem:[%s204 + $0x5c] sm:$0xf]
        %v260 = vld [vmem:[%s204 + $0x60] sm:$0xf]
        %v261 = vld [vmem:[%s204 + $0x64] sm:$0xf]
        %v262 = vld [vmem:[%s204 + $0x68] sm:$0xf]
        %v263 = vld [vmem:[%s204 + $0x6c] sm:$0xf]
        %v264 = vld [vmem:[%s204 + $0x70] sm:$0xf]
        %v265 = vld [vmem:[%s204 + $0x74] sm:$0xf]
        %v266 = vld [vmem:[%s204 + $0x78] sm:$0xf]
        %v267 = vld [vmem:[%s204 + $0x7c] sm:$0xf]
        %v268 = vld [vmem:[%s204 + $0x80] sm:$0xf]
        %v269 = vld [vmem:[%s204 + $0x84] sm:$0xf]
        %v270 = vld [vmem:[%s204 + $0x88] sm:$0xf]
        %v271 = vld [vmem:[%s204 + $0x8c] sm:$0xf]
        %v272 = vld [vmem:[%s204 + $0x90] sm:$0xf]
        %v273 = vld [vmem:[%s204 + $0x94] sm:$0xf]
        %v274 = vld [vmem:[%s204 + $0x98] sm:$0xf]
        %v275 = vld [vmem:[%s204 + $0x9c] sm:$0xf]
        %v276 = vld [vmem:[%s204 + $0xa0] sm:$0xf]
        %v277 = vld [vmem:[%s204 + $0xa4] sm:$0xf]
        %v278 = vld [vmem:[%s204 + $0xa8] sm:$0xf]
        %v279 = vld [vmem:[%s204 + $0xac] sm:$0xf]
        %v280 = vld [vmem:[%s204 + $0xb0] sm:$0xf]
        %v281 = vld [vmem:[%s204 + $0xb4] sm:$0xf]
        %v282 = vld [vmem:[%s204 + $0xb8] sm:$0xf]
        %v283 = vld [vmem:[%s204 + $0xbc] sm:$0xf]
        %v284 = vld [vmem:[%s204 + $0xc0] sm:$0xf]
        %v285 = vld [vmem:[%s204 + $0xc4] sm:$0xf]
        %v286 = vld [vmem:[%s204 + $0xc8] sm:$0xf]
        %v287 = vld [vmem:[%s204 + $0xcc] sm:$0xf]
        %v288 = vld [vmem:[%s204 + $0xd0] sm:$0xf]
        %v289 = vld [vmem:[%s204 + $0xd4] sm:$0xf]
        %v290 = vld [vmem:[%s204 + $0xd8] sm:$0xf]
        %v291 = vld [vmem:[%s204 + $0xdc] sm:$0xf]
        %v292 = vld [vmem:[%s204 + $0xe0] sm:$0xf]
        %v293 = vld [vmem:[%s204 + $0xe4] sm:$0xf]
        %v294 = vld [vmem:[%s204 + $0xe8] sm:$0xf]
        %v295 = vld [vmem:[%s204 + $0xec] sm:$0xf]
        %v296 = vld [vmem:[%s204 + $0xf0] sm:$0xf]
        %v297 = vld [vmem:[%s204 + $0xf4] sm:$0xf]
        %v298 = vld [vmem:[%s204 + $0xf8] sm:$0xf]
        %v299 = vld [vmem:[%s204 + $0xfc] sm:$0xf]
        %v300 = vld [vmem:[#allocation5] sm:$0xff]
        %v301 = vld [vmem:[#allocation5 + $0x8] sm:$0xff]
        %v302 = vld [vmem:[#allocation5 + $0x10] sm:$0xff]
        %v303 = vld [vmem:[#allocation5 + $0x18] sm:$0xff]
        %v304 = vld [vmem:[#allocation5 + $0x20] sm:$0xff]
        %v305 = vld [vmem:[#allocation5 + $0x28] sm:$0xff]
        %v306 = vld [vmem:[#allocation5 + $0x30] sm:$0xff]
        %v307 = vld [vmem:[#allocation5 + $0x38] sm:$0xff]
        %v308 = vld [vmem:[#allocation5 + $0x40] sm:$0xff]
        %v309 = vld [vmem:[#allocation5 + $0x48] sm:$0xff]
        %v310 = vld [vmem:[#allocation5 + $0x50] sm:$0xff]
        %v311 = vld [vmem:[#allocation5 + $0x58] sm:$0xff]
        %v312 = vld [vmem:[#allocation5 + $0x60] sm:$0xff]
        %v313 = vld [vmem:[#allocation5 + $0x68] sm:$0xff]
        %v314 = vld [vmem:[#allocation5 + $0x70] sm:$0xff]
        %v315 = vld [vmem:[#allocation5 + $0x78] sm:$0xff]
        %v316 = vld [vmem:[#allocation5 + $0x80] sm:$0xff]
        %v317 = vld [vmem:[#allocation5 + $0x88] sm:$0xff]
        %v318 = vld [vmem:[#allocation5 + $0x90] sm:$0xff]
        %v319 = vld [vmem:[#allocation5 + $0x98] sm:$0xff]
        %v320 = vld [vmem:[#allocation5 + $0xa0] sm:$0xff]
        %v321 = vld [vmem:[#allocation5 + $0xa8] sm:$0xff]
        %v322 = vld [vmem:[#allocation5 + $0xb0] sm:$0xff]
        %v323 = vld [vmem:[#allocation5 + $0xb8] sm:$0xff]
        %v324 = vld [vmem:[#allocation5 + $0xc0] sm:$0xff]
        %v325 = vld [vmem:[#allocation5 + $0xc8] sm:$0xff]
        %v326 = vld [vmem:[#allocation5 + $0xd0] sm:$0xff]
        %v327 = vld [vmem:[#allocation5 + $0xd8] sm:$0xff]
        %v328 = vld [vmem:[#allocation5 + $0xe0] sm:$0xff]
        %v329 = vld [vmem:[#allocation5 + $0xe8] sm:$0xff]
        %v330 = vld [vmem:[#allocation5 + $0xf0] sm:$0xff]
        %v331 = vld [vmem:[#allocation5 + $0xf8] sm:$0xff]
        %v332 = vld [vmem:[#allocation5 + $0x100] sm:$0xff]
        %v333 = vld [vmem:[#allocation5 + $0x108] sm:$0xff]
        %v334 = vld [vmem:[#allocation5 + $0x110] sm:$0xff]
        %v335 = vld [vmem:[#allocation5 + $0x118] sm:$0xff]
        %v336 = vld [vmem:[#allocation5 + $0x120] sm:$0xff]
        %v337 = vld [vmem:[#allocation5 + $0x128] sm:$0xff]
        %v338 = vld [vmem:[#allocation5 + $0x130] sm:$0xff]
        %v339 = vld [vmem:[#allocation5 + $0x138] sm:$0xff]
        %v340 = vld [vmem:[#allocation5 + $0x140] sm:$0xff]
        %v341 = vld [vmem:[#allocation5 + $0x148] sm:$0xff]
        %v342 = vld [vmem:[#allocation5 + $0x150] sm:$0xff]
        %v343 = vld [vmem:[#allocation5 + $0x158] sm:$0xff]
        %v344 = vld [vmem:[#allocation5 + $0x160] sm:$0xff]
        %v345 = vld [vmem:[#allocation5 + $0x168] sm:$0xff]
        %v346 = vld [vmem:[#allocation5 + $0x170] sm:$0xff]
        %v347 = vld [vmem:[#allocation5 + $0x178] sm:$0xff]
        %v348 = vld [vmem:[#allocation5 + $0x180] sm:$0xff]
        %v349 = vld [vmem:[#allocation5 + $0x188] sm:$0xff]
        %v350 = vld [vmem:[#allocation5 + $0x190] sm:$0xff]
        %v351 = vld [vmem:[#allocation5 + $0x198] sm:$0xff]
        %v352 = vld [vmem:[#allocation5 + $0x1a0] sm:$0xff]
        %v353 = vld [vmem:[#allocation5 + $0x1a8] sm:$0xff]
        %v354 = vld [vmem:[#allocation5 + $0x1b0] sm:$0xff]
        %v355 = vld [vmem:[#allocation5 + $0x1b8] sm:$0xff]
        %v356 = vld [vmem:[#allocation5 + $0x1c0] sm:$0xff]
        %v357 = vld [vmem:[#allocation5 + $0x1c8] sm:$0xff]
        %v358 = vld [vmem:[#allocation5 + $0x1d0] sm:$0xff]
        %v359 = vld [vmem:[#allocation5 + $0x1d8] sm:$0xff]
        %v360 = vld [vmem:[#allocation5 + $0x1e0] sm:$0xff]
        %v361 = vld [vmem:[#allocation5 + $0x1e8] sm:$0xff]
        %v362 = vld [vmem:[#allocation5 + $0x1f0] sm:$0xff]
        %v363 = vld [vmem:[#allocation5 + $0x1f8] sm:$0xff]
        %v364 = vld [vmem:[#allocation5 + $0x200] sm:$0xff]
        %v365 = vld [vmem:[#allocation5 + $0x208] sm:$0xff]
        %v366 = vld [vmem:[#allocation5 + $0x210] sm:$0xff]
        %v367 = vld [vmem:[#allocation5 + $0x218] sm:$0xff]
        %v368 = vld [vmem:[#allocation5 + $0x220] sm:$0xff]
        %v369 = vld [vmem:[#allocation5 + $0x228] sm:$0xff]
        %v370 = vld [vmem:[#allocation5 + $0x230] sm:$0xff]
        %v371 = vld [vmem:[#allocation5 + $0x238] sm:$0xff]
        %v372 = vld [vmem:[#allocation5 + $0x240] sm:$0xff]
        %v373 = vld [vmem:[#allocation5 + $0x248] sm:$0xff]
        %v374 = vld [vmem:[#allocation5 + $0x250] sm:$0xff]
        %v375 = vld [vmem:[#allocation5 + $0x258] sm:$0xff]
        %v376 = vld [vmem:[#allocation5 + $0x260] sm:$0xff]
        %v377 = vld [vmem:[#allocation5 + $0x268] sm:$0xff]
        %v378 = vld [vmem:[#allocation5 + $0x270] sm:$0xff]
        %v379 = vld [vmem:[#allocation5 + $0x278] sm:$0xff]
        %v380 = vld [vmem:[#allocation5 + $0x280] sm:$0xff]
        %v381 = vld [vmem:[#allocation5 + $0x288] sm:$0xff]
        %v382 = vld [vmem:[#allocation5 + $0x290] sm:$0xff]
        %v383 = vld [vmem:[#allocation5 + $0x298] sm:$0xff]
        %v384 = vld [vmem:[#allocation5 + $0x2a0] sm:$0xff]
        %v385 = vld [vmem:[#allocation5 + $0x2a8] sm:$0xff]
        %v386 = vld [vmem:[#allocation5 + $0x2b0] sm:$0xff]
        %v387 = vld [vmem:[#allocation5 + $0x2b8] sm:$0xff]
        %v388 = vld [vmem:[#allocation5 + $0x2c0] sm:$0xff]
        %v389 = vld [vmem:[#allocation5 + $0x2c8] sm:$0xff]
        %v390 = vld [vmem:[#allocation5 + $0x2d0] sm:$0xff]
        %v391 = vld [vmem:[#allocation5 + $0x2d8] sm:$0xff]
        %v392 = vld [vmem:[#allocation5 + $0x2e0] sm:$0xff]
        %v393 = vld [vmem:[#allocation5 + $0x2e8] sm:$0xff]
        %v394 = vld [vmem:[#allocation5 + $0x2f0] sm:$0xff]
        %v395 = vld [vmem:[#allocation5 + $0x2f8] sm:$0xff]
        %v396 = vld [vmem:[#allocation5 + $0x300] sm:$0xff]
        %v397 = vld [vmem:[#allocation5 + $0x308] sm:$0xff]
        %v398 = vld [vmem:[#allocation5 + $0x310] sm:$0xff]
        %v399 = vld [vmem:[#allocation5 + $0x318] sm:$0xff]
        %v400 = vld [vmem:[#allocation5 + $0x320] sm:$0xff]
        %v401 = vld [vmem:[#allocation5 + $0x328] sm:$0xff]
        %v402 = vld [vmem:[#allocation5 + $0x330] sm:$0xff]
        %v403 = vld [vmem:[#allocation5 + $0x338] sm:$0xff]
        %v404 = vld [vmem:[#allocation5 + $0x340] sm:$0xff]
        %v405 = vld [vmem:[#allocation5 + $0x348] sm:$0xff]
        %v406 = vld [vmem:[#allocation5 + $0x350] sm:$0xff]
        %v407 = vld [vmem:[#allocation5 + $0x358] sm:$0xff]
        %v408 = vld [vmem:[#allocation5 + $0x360] sm:$0xff]
        %v409 = vld [vmem:[#allocation5 + $0x368] sm:$0xff]
        %v410 = vld [vmem:[#allocation5 + $0x370] sm:$0xff]
        %v411 = vld [vmem:[#allocation5 + $0x378] sm:$0xff]
        %v412 = vld [vmem:[#allocation5 + $0x380] sm:$0xff]
        %v413 = vld [vmem:[#allocation5 + $0x388] sm:$0xff]
        %v414 = vld [vmem:[#allocation5 + $0x390] sm:$0xff]
        %v415 = vld [vmem:[#allocation5 + $0x398] sm:$0xff]
        %v416 = vld [vmem:[#allocation5 + $0x3a0] sm:$0xff]
        %v417 = vld [vmem:[#allocation5 + $0x3a8] sm:$0xff]
        %v418 = vld [vmem:[#allocation5 + $0x3b0] sm:$0xff]
        %v419 = vld [vmem:[#allocation5 + $0x3b8] sm:$0xff]
        %v420 = vld [vmem:[#allocation5 + $0x3c0] sm:$0xff]
        %v421 = vld [vmem:[#allocation5 + $0x3c8] sm:$0xff]
        %v422 = vld [vmem:[#allocation5 + $0x3d0] sm:$0xff]
        %v423 = vld [vmem:[#allocation5 + $0x3d8] sm:$0xff]
        %v424 = vld [vmem:[#allocation5 + $0x3e0] sm:$0xff]
        %v425 = vld [vmem:[#allocation5 + $0x3e8] sm:$0xff]
        %v426 = vld [vmem:[#allocation5 + $0x3f0] sm:$0xff]
        %v427 = vld [vmem:[#allocation5 + $0x3f8] sm:$0xff]
        %v428 = vld [vmem:[#allocation5 + $0x400] sm:$0xff]
        %v429 = vld [vmem:[#allocation5 + $0x408] sm:$0xff]
        %v430 = vld [vmem:[#allocation5 + $0x410] sm:$0xff]
        %v431 = vld [vmem:[#allocation5 + $0x418] sm:$0xff]
        %v564 = vunpack.c.l.b16 %v300
        %v565 = vunpack.c.h.b16 %v300
        %v566 = vunpack.c.l.b16 %v301
        %v567 = vunpack.c.h.b16 %v301
        %v568 = vunpack.c.l.b16 %v302
        %v569 = vunpack.c.h.b16 %v302
        %v570 = vunpack.c.l.b16 %v303
        %v571 = vunpack.c.h.b16 %v303
        %v572 = vunpack.c.l.b16 %v304
        %v573 = vunpack.c.h.b16 %v304
        %v574 = vunpack.c.l.b16 %v305
        %v575 = vunpack.c.h.b16 %v305
        %v576 = vunpack.c.l.b16 %v306
        %v577 = vunpack.c.h.b16 %v306
        %v578 = vunpack.c.l.b16 %v307
        %v579 = vunpack.c.h.b16 %v307
        %v580 = vunpack.c.l.b16 %v308
        %v581 = vunpack.c.h.b16 %v308
        %v582 = vunpack.c.l.b16 %v309
        %v583 = vunpack.c.h.b16 %v309
        %v584 = vunpack.c.l.b16 %v310
        %v585 = vunpack.c.h.b16 %v310
        %v586 = vunpack.c.l.b16 %v311
        %v587 = vunpack.c.h.b16 %v311
        %v588 = vunpack.c.l.b16 %v312
        %v589 = vunpack.c.h.b16 %v312
        %v590 = vunpack.c.l.b16 %v313
        %v591 = vunpack.c.h.b16 %v313
        %v592 = vunpack.c.l.b16 %v314
        %v593 = vunpack.c.h.b16 %v314
        %v594 = vunpack.c.l.b16 %v315
        %v595 = vunpack.c.h.b16 %v315
        %v596 = vunpack.c.l.b16 %v316
        %v597 = vunpack.c.h.b16 %v316
        %v598 = vunpack.c.l.b16 %v317
        %v599 = vunpack.c.h.b16 %v317
        %v600 = vunpack.c.l.b16 %v318
        %v601 = vunpack.c.h.b16 %v318
        %v602 = vunpack.c.l.b16 %v319
        %v603 = vunpack.c.h.b16 %v319
        %v604 = vunpack.c.l.b16 %v320
        %v605 = vunpack.c.h.b16 %v320
        %v606 = vunpack.c.l.b16 %v321
        %v607 = vunpack.c.h.b16 %v321
        %v608 = vunpack.c.l.b16 %v322
        %v609 = vunpack.c.h.b16 %v322
        %v610 = vunpack.c.l.b16 %v323
        %v611 = vunpack.c.h.b16 %v323
        %v612 = vunpack.c.l.b16 %v324
        %v613 = vunpack.c.h.b16 %v324
        %v614 = vunpack.c.l.b16 %v325
        %v615 = vunpack.c.h.b16 %v325
        %v616 = vunpack.c.l.b16 %v326
        %v617 = vunpack.c.h.b16 %v326
        %v618 = vunpack.c.l.b16 %v327
        %v619 = vunpack.c.h.b16 %v327
        %v620 = vunpack.c.l.b16 %v328
        %v621 = vunpack.c.h.b16 %v328
        %v622 = vunpack.c.l.b16 %v329
        %v623 = vunpack.c.h.b16 %v329
        %v624 = vunpack.c.l.b16 %v330
        %v625 = vunpack.c.h.b16 %v330
        %v626 = vunpack.c.l.b16 %v331
        %v627 = vunpack.c.h.b16 %v331
        %v628 = vunpack.c.l.b16 %v332
        %v629 = vunpack.c.h.b16 %v332
        %v630 = vunpack.c.l.b16 %v333
        %v631 = vunpack.c.h.b16 %v333
        %v632 = vunpack.c.l.b16 %v334
        %v633 = vunpack.c.h.b16 %v334
        %v634 = vunpack.c.l.b16 %v335
        %v635 = vunpack.c.h.b16 %v335
        %v636 = vunpack.c.l.b16 %v336
        %v637 = vunpack.c.h.b16 %v336
        %v638 = vunpack.c.l.b16 %v337
        %v639 = vunpack.c.h.b16 %v337
        %v640 = vunpack.c.l.b16 %v338
        %v641 = vunpack.c.h.b16 %v338
        %v642 = vunpack.c.l.b16 %v339
        %v643 = vunpack.c.h.b16 %v339
        %v644 = vunpack.c.l.b16 %v340
        %v645 = vunpack.c.h.b16 %v340
        %v646 = vunpack.c.l.b16 %v341
        %v647 = vunpack.c.h.b16 %v341
        %v648 = vunpack.c.l.b16 %v342
        %v649 = vunpack.c.h.b16 %v342
        %v650 = vunpack.c.l.b16 %v343
        %v651 = vunpack.c.h.b16 %v343
        %v652 = vunpack.c.l.b16 %v344
        %v653 = vunpack.c.h.b16 %v344
        %v654 = vunpack.c.l.b16 %v345
        %v655 = vunpack.c.h.b16 %v345
        %v656 = vunpack.c.l.b16 %v346
        %v657 = vunpack.c.h.b16 %v346
        %v658 = vunpack.c.l.b16 %v347
        %v659 = vunpack.c.h.b16 %v347
        %v660 = vunpack.c.l.b16 %v348
        %v661 = vunpack.c.h.b16 %v348
        %v662 = vunpack.c.l.b16 %v349
        %v663 = vunpack.c.h.b16 %v349
        %v664 = vunpack.c.l.b16 %v350
        %v665 = vunpack.c.h.b16 %v350
        %v666 = vunpack.c.l.b16 %v351
        %v667 = vunpack.c.h.b16 %v351
        %v668 = vunpack.c.l.b16 %v352
        %v669 = vunpack.c.h.b16 %v352
        %v670 = vunpack.c.l.b16 %v353
        %v671 = vunpack.c.h.b16 %v353
        %v672 = vunpack.c.l.b16 %v354
        %v673 = vunpack.c.h.b16 %v354
        %v674 = vunpack.c.l.b16 %v355
        %v675 = vunpack.c.h.b16 %v355
        %v676 = vunpack.c.l.b16 %v356
        %v677 = vunpack.c.h.b16 %v356
        %v678 = vunpack.c.l.b16 %v357
        %v679 = vunpack.c.h.b16 %v357
        %v680 = vunpack.c.l.b16 %v358
        %v681 = vunpack.c.h.b16 %v358
        %v682 = vunpack.c.l.b16 %v359
        %v683 = vunpack.c.h.b16 %v359
        %v684 = vunpack.c.l.b16 %v360
        %v685 = vunpack.c.h.b16 %v360
        %v686 = vunpack.c.l.b16 %v361
        %v687 = vunpack.c.h.b16 %v361
        %v688 = vunpack.c.l.b16 %v362
        %v689 = vunpack.c.h.b16 %v362
        %v690 = vunpack.c.l.b16 %v363
        %v691 = vunpack.c.h.b16 %v363
        %v692 = vunpack.c.l.b16 %v364
        %v693 = vunpack.c.h.b16 %v364
        %v694 = vunpack.c.l.b16 %v365
        %v695 = vunpack.c.h.b16 %v365
        %v696 = vunpack.c.l.b16 %v366
        %v697 = vunpack.c.h.b16 %v366
        %v698 = vunpack.c.l.b16 %v367
        %v699 = vunpack.c.h.b16 %v367
        %v700 = vunpack.c.l.b16 %v368
        %v701 = vunpack.c.h.b16 %v368
        %v702 = vunpack.c.l.b16 %v369
        %v703 = vunpack.c.h.b16 %v369
        %v704 = vunpack.c.l.b16 %v370
        %v705 = vunpack.c.h.b16 %v370
        %v706 = vunpack.c.l.b16 %v371
        %v707 = vunpack.c.h.b16 %v371
        %v708 = vunpack.c.l.b16 %v372
        %v709 = vunpack.c.h.b16 %v372
        %v710 = vunpack.c.l.b16 %v373
        %v711 = vunpack.c.h.b16 %v373
        %v712 = vunpack.c.l.b16 %v374
        %v713 = vunpack.c.h.b16 %v374
        %v714 = vunpack.c.l.b16 %v375
        %v715 = vunpack.c.h.b16 %v375
        %v716 = vunpack.c.l.b16 %v376
        %v717 = vunpack.c.h.b16 %v376
        %v718 = vunpack.c.l.b16 %v377
        %v719 = vunpack.c.h.b16 %v377
        %v720 = vunpack.c.l.b16 %v378
        %v721 = vunpack.c.h.b16 %v378
        %v722 = vunpack.c.l.b16 %v379
        %v723 = vunpack.c.h.b16 %v379
        %v724 = vunpack.c.l.b16 %v380
        %v725 = vunpack.c.h.b16 %v380
        %v726 = vunpack.c.l.b16 %v381
        %v727 = vunpack.c.h.b16 %v381
        %v728 = vunpack.c.l.b16 %v382
        %v729 = vunpack.c.h.b16 %v382
        %v730 = vunpack.c.l.b16 %v383
        %v731 = vunpack.c.h.b16 %v383
        %v732 = vunpack.c.l.b16 %v384
        %v733 = vunpack.c.h.b16 %v384
        %v734 = vunpack.c.l.b16 %v385
        %v735 = vunpack.c.h.b16 %v385
        %v736 = vunpack.c.l.b16 %v386
        %v737 = vunpack.c.h.b16 %v386
        %v738 = vunpack.c.l.b16 %v387
        %v739 = vunpack.c.h.b16 %v387
        %v740 = vunpack.c.l.b16 %v388
        %v741 = vunpack.c.h.b16 %v388
        %v742 = vunpack.c.l.b16 %v389
        %v743 = vunpack.c.h.b16 %v389
        %v744 = vunpack.c.l.b16 %v390
        %v745 = vunpack.c.h.b16 %v390
        %v746 = vunpack.c.l.b16 %v391
        %v747 = vunpack.c.h.b16 %v391
        %v748 = vunpack.c.l.b16 %v392
        %v749 = vunpack.c.h.b16 %v392
        %v750 = vunpack.c.l.b16 %v393
        %v751 = vunpack.c.h.b16 %v393
        %v752 = vunpack.c.l.b16 %v394
        %v753 = vunpack.c.h.b16 %v394
        %v754 = vunpack.c.l.b16 %v395
        %v755 = vunpack.c.h.b16 %v395
        %v756 = vunpack.c.l.b16 %v396
        %v757 = vunpack.c.h.b16 %v396
        %v758 = vunpack.c.l.b16 %v397
        %v759 = vunpack.c.h.b16 %v397
        %v760 = vunpack.c.l.b16 %v398
        %v761 = vunpack.c.h.b16 %v398
        %v762 = vunpack.c.l.b16 %v399
        %v763 = vunpack.c.h.b16 %v399
        %v764 = vunpack.c.l.b16 %v400
        %v765 = vunpack.c.h.b16 %v400
        %v766 = vunpack.c.l.b16 %v401
        %v767 = vunpack.c.h.b16 %v401
        %v768 = vunpack.c.l.b16 %v402
        %v769 = vunpack.c.h.b16 %v402
        %v770 = vunpack.c.l.b16 %v403
        %v771 = vunpack.c.h.b16 %v403
        %v772 = vunpack.c.l.b16 %v404
        %v773 = vunpack.c.h.b16 %v404
        %v774 = vunpack.c.l.b16 %v405
        %v775 = vunpack.c.h.b16 %v405
        %v776 = vunpack.c.l.b16 %v406
        %v777 = vunpack.c.h.b16 %v406
        %v778 = vunpack.c.l.b16 %v407
        %v779 = vunpack.c.h.b16 %v407
        %v780 = vunpack.c.l.b16 %v408
        %v781 = vunpack.c.h.b16 %v408
        %v782 = vunpack.c.l.b16 %v409
        %v783 = vunpack.c.h.b16 %v409
        %v784 = vunpack.c.l.b16 %v410
        %v785 = vunpack.c.h.b16 %v410
        %v786 = vunpack.c.l.b16 %v411
        %v787 = vunpack.c.h.b16 %v411
        %v788 = vunpack.c.l.b16 %v412
        %v789 = vunpack.c.h.b16 %v412
        %v790 = vunpack.c.l.b16 %v413
        %v791 = vunpack.c.h.b16 %v413
        %v792 = vunpack.c.l.b16 %v414
        %v793 = vunpack.c.h.b16 %v414
        %v794 = vunpack.c.l.b16 %v415
        %v795 = vunpack.c.h.b16 %v415
        %v796 = vunpack.c.l.b16 %v416
        %v797 = vunpack.c.h.b16 %v416
        %v798 = vunpack.c.l.b16 %v417
        %v799 = vunpack.c.h.b16 %v417
        %v800 = vunpack.c.l.b16 %v418
        %v801 = vunpack.c.h.b16 %v418
        %v802 = vunpack.c.l.b16 %v419
        %v803 = vunpack.c.h.b16 %v419
        %v804 = vunpack.c.l.b16 %v420
        %v805 = vunpack.c.h.b16 %v420
        %v806 = vunpack.c.l.b16 %v421
        %v807 = vunpack.c.h.b16 %v421
        %v808 = vunpack.c.l.b16 %v422
        %v809 = vunpack.c.h.b16 %v422
        %v810 = vunpack.c.l.b16 %v423
        %v811 = vunpack.c.h.b16 %v423
        %v812 = vunpack.c.l.b16 %v424
        %v813 = vunpack.c.h.b16 %v424
        %v814 = vunpack.c.l.b16 %v425
        %v815 = vunpack.c.h.b16 %v425
        %v816 = vunpack.c.l.b16 %v426
        %v817 = vunpack.c.h.b16 %v426
        %v818 = vunpack.c.l.b16 %v427
        %v819 = vunpack.c.h.b16 %v427
        %v820 = vunpack.c.l.b16 %v428
        %v821 = vunpack.c.h.b16 %v428
        %v822 = vunpack.c.l.b16 %v429
        %v823 = vunpack.c.h.b16 %v429
        %v824 = vunpack.c.l.b16 %v430
        %v825 = vunpack.c.h.b16 %v430
        %v826 = vunpack.c.l.b16 %v431
        %v827 = vunpack.c.h.b16 %v431
        %v828 = vpack.c.b16 %v568, %v564
        %v829 = vpack.c.b16 %v569, %v565
        %v830 = vpack.c.b16 %v570, %v566
        %v831 = vpack.c.b16 %v571, %v567
        %v832 = vpack.c.b16 %v576, %v572
        %v833 = vpack.c.b16 %v577, %v573
        %v834 = vpack.c.b16 %v578, %v574
        %v835 = vpack.c.b16 %v579, %v575
        %v836 = vpack.c.b16 %v584, %v580
        %v837 = vpack.c.b16 %v585, %v581
        %v838 = vpack.c.b16 %v586, %v582
        %v839 = vpack.c.b16 %v587, %v583
        %v840 = vpack.c.b16 %v592, %v588
        %v841 = vpack.c.b16 %v593, %v589
        %v842 = vpack.c.b16 %v594, %v590
        %v843 = vpack.c.b16 %v595, %v591
        %v844 = vpack.c.b16 %v600, %v596
        %v845 = vpack.c.b16 %v601, %v597
        %v846 = vpack.c.b16 %v602, %v598
        %v847 = vpack.c.b16 %v603, %v599
        %v848 = vpack.c.b16 %v608, %v604
        %v849 = vpack.c.b16 %v609, %v605
        %v850 = vpack.c.b16 %v610, %v606
        %v851 = vpack.c.b16 %v611, %v607
        %v852 = vpack.c.b16 %v616, %v612
        %v853 = vpack.c.b16 %v617, %v613
        %v854 = vpack.c.b16 %v618, %v614
        %v855 = vpack.c.b16 %v619, %v615
        %v856 = vpack.c.b16 %v624, %v620
        %v857 = vpack.c.b16 %v625, %v621
        %v858 = vpack.c.b16 %v626, %v622
        %v859 = vpack.c.b16 %v627, %v623
        %v860 = vpack.c.b16 %v632, %v628
        %v861 = vpack.c.b16 %v633, %v629
        %v862 = vpack.c.b16 %v634, %v630
        %v863 = vpack.c.b16 %v635, %v631
        %v864 = vpack.c.b16 %v640, %v636
        %v865 = vpack.c.b16 %v641, %v637
        %v866 = vpack.c.b16 %v642, %v638
        %v867 = vpack.c.b16 %v643, %v639
        %v868 = vpack.c.b16 %v648, %v644
        %v869 = vpack.c.b16 %v649, %v645
        %v870 = vpack.c.b16 %v650, %v646
        %v871 = vpack.c.b16 %v651, %v647
        %v872 = vpack.c.b16 %v656, %v652
        %v873 = vpack.c.b16 %v657, %v653
        %v874 = vpack.c.b16 %v658, %v654
        %v875 = vpack.c.b16 %v659, %v655
        %v876 = vpack.c.b16 %v664, %v660
        %v877 = vpack.c.b16 %v665, %v661
        %v878 = vpack.c.b16 %v666, %v662
        %v879 = vpack.c.b16 %v667, %v663
        %v880 = vpack.c.b16 %v672, %v668
        %v881 = vpack.c.b16 %v673, %v669
        %v882 = vpack.c.b16 %v674, %v670
        %v883 = vpack.c.b16 %v675, %v671
        %v884 = vpack.c.b16 %v680, %v676
        %v885 = vpack.c.b16 %v681, %v677
        %v886 = vpack.c.b16 %v682, %v678
        %v887 = vpack.c.b16 %v683, %v679
        %v888 = vpack.c.b16 %v688, %v684
        %v889 = vpack.c.b16 %v689, %v685
        %v890 = vpack.c.b16 %v690, %v686
        %v891 = vpack.c.b16 %v691, %v687
        %v892 = vpack.c.b16 %v696, %v692
        %v893 = vpack.c.b16 %v697, %v693
        %v894 = vpack.c.b16 %v698, %v694
        %v895 = vpack.c.b16 %v699, %v695
        %v896 = vpack.c.b16 %v704, %v700
        %v897 = vpack.c.b16 %v705, %v701
        %v898 = vpack.c.b16 %v706, %v702
        %v899 = vpack.c.b16 %v707, %v703
        %v900 = vpack.c.b16 %v712, %v708
        %v901 = vpack.c.b16 %v713, %v709
        %v902 = vpack.c.b16 %v714, %v710
        %v903 = vpack.c.b16 %v715, %v711
        %v904 = vpack.c.b16 %v720, %v716
        %v905 = vpack.c.b16 %v721, %v717
        %v906 = vpack.c.b16 %v722, %v718
        %v907 = vpack.c.b16 %v723, %v719
        %v908 = vpack.c.b16 %v728, %v724
        %v909 = vpack.c.b16 %v729, %v725
        %v910 = vpack.c.b16 %v730, %v726
        %v911 = vpack.c.b16 %v731, %v727
        %v912 = vpack.c.b16 %v736, %v732
        %v913 = vpack.c.b16 %v737, %v733
        %v914 = vpack.c.b16 %v738, %v734
        %v915 = vpack.c.b16 %v739, %v735
        %v916 = vpack.c.b16 %v744, %v740
        %v917 = vpack.c.b16 %v745, %v741
        %v918 = vpack.c.b16 %v746, %v742
        %v919 = vpack.c.b16 %v747, %v743
        %v920 = vpack.c.b16 %v752, %v748
        %v921 = vpack.c.b16 %v753, %v749
        %v922 = vpack.c.b16 %v754, %v750
        %v923 = vpack.c.b16 %v755, %v751
        %v924 = vpack.c.b16 %v760, %v756
        %v925 = vpack.c.b16 %v761, %v757
        %v926 = vpack.c.b16 %v762, %v758
        %v927 = vpack.c.b16 %v763, %v759
        %v928 = vpack.c.b16 %v768, %v764
        %v929 = vpack.c.b16 %v769, %v765
        %v930 = vpack.c.b16 %v770, %v766
        %v931 = vpack.c.b16 %v771, %v767
        %v932 = vpack.c.b16 %v776, %v772
        %v933 = vpack.c.b16 %v777, %v773
        %v934 = vpack.c.b16 %v778, %v774
        %v935 = vpack.c.b16 %v779, %v775
        %v936 = vpack.c.b16 %v784, %v780
        %v937 = vpack.c.b16 %v785, %v781
        %v938 = vpack.c.b16 %v786, %v782
        %v939 = vpack.c.b16 %v787, %v783
        %v940 = vpack.c.b16 %v792, %v788
        %v941 = vpack.c.b16 %v793, %v789
        %v942 = vpack.c.b16 %v794, %v790
        %v943 = vpack.c.b16 %v795, %v791
        %v944 = vpack.c.b16 %v800, %v796
        %v945 = vpack.c.b16 %v801, %v797
        %v946 = vpack.c.b16 %v802, %v798
        %v947 = vpack.c.b16 %v803, %v799
        %v948 = vpack.c.b16 %v808, %v804
        %v949 = vpack.c.b16 %v809, %v805
        %v950 = vpack.c.b16 %v810, %v806
        %v951 = vpack.c.b16 %v811, %v807
        %v952 = vpack.c.b16 %v816, %v812
        %v953 = vpack.c.b16 %v817, %v813
        %v954 = vpack.c.b16 %v818, %v814
        %v955 = vpack.c.b16 %v819, %v815
        %v956 = vpack.c.b16 %v824, %v820
        %v957 = vpack.c.b16 %v825, %v821
        %v958 = vpack.c.b16 %v826, %v822
        %v959 = vpack.c.b16 %v827, %v823
        %v1156 = vunpack.c.l.b16 %v236
        %v1157 = vunpack.c.l.b16 %v237
        %v1158 = vunpack.c.l.b16 %v238
        %v1159 = vunpack.c.l.b16 %v239
        %v1160 = vunpack.c.l.b16 %v240
        %v1161 = vunpack.c.l.b16 %v241
        %v1162 = vunpack.c.l.b16 %v242
        %v1163 = vunpack.c.l.b16 %v243
        %v1164 = vunpack.c.l.b16 %v244
        %v1165 = vunpack.c.l.b16 %v245
        %v1166 = vunpack.c.l.b16 %v246
        %v1167 = vunpack.c.l.b16 %v247
        %v1168 = vunpack.c.l.b16 %v248
        %v1169 = vunpack.c.l.b16 %v249
        %v1170 = vunpack.c.l.b16 %v250
        %v1171 = vunpack.c.l.b16 %v251
        %v1172 = vunpack.c.l.b16 %v252
        %v1173 = vunpack.c.l.b16 %v253
        %v1174 = vunpack.c.l.b16 %v254
        %v1175 = vunpack.c.l.b16 %v255
        %v1176 = vunpack.c.l.b16 %v256
        %v1177 = vunpack.c.l.b16 %v257
        %v1178 = vunpack.c.l.b16 %v258
        %v1179 = vunpack.c.l.b16 %v259
        %v1180 = vunpack.c.l.b16 %v260
        %v1181 = vunpack.c.l.b16 %v261
        %v1182 = vunpack.c.l.b16 %v262
        %v1183 = vunpack.c.l.b16 %v263
        %v1184 = vunpack.c.l.b16 %v264
        %v1185 = vunpack.c.l.b16 %v265
        %v1186 = vunpack.c.l.b16 %v266
        %v1187 = vunpack.c.l.b16 %v267
        %v1188 = vunpack.c.l.b16 %v268
        %v1189 = vunpack.c.l.b16 %v269
        %v1190 = vunpack.c.l.b16 %v270
        %v1191 = vunpack.c.l.b16 %v271
        %v1192 = vunpack.c.l.b16 %v272
        %v1193 = vunpack.c.l.b16 %v273
        %v1194 = vunpack.c.l.b16 %v274
        %v1195 = vunpack.c.l.b16 %v275
        %v1196 = vunpack.c.l.b16 %v276
        %v1197 = vunpack.c.l.b16 %v277
        %v1198 = vunpack.c.l.b16 %v278
        %v1199 = vunpack.c.l.b16 %v279
        %v1200 = vunpack.c.l.b16 %v280
        %v1201 = vunpack.c.l.b16 %v281
        %v1202 = vunpack.c.l.b16 %v282
        %v1203 = vunpack.c.l.b16 %v283
        %v1204 = vunpack.c.l.b16 %v284
        %v1205 = vunpack.c.l.b16 %v285
        %v1206 = vunpack.c.l.b16 %v286
        %v1207 = vunpack.c.l.b16 %v287
        %v1208 = vunpack.c.l.b16 %v288
        %v1209 = vunpack.c.l.b16 %v289
        %v1210 = vunpack.c.l.b16 %v290
        %v1211 = vunpack.c.l.b16 %v291
        %v1212 = vunpack.c.l.b16 %v292
        %v1213 = vunpack.c.l.b16 %v293
        %v1214 = vunpack.c.l.b16 %v294
        %v1215 = vunpack.c.l.b16 %v295
        %v1216 = vunpack.c.l.b16 %v296
        %v1217 = vunpack.c.l.b16 %v297
        %v1218 = vunpack.c.l.b16 %v298
        %v1219 = vunpack.c.l.b16 %v299
        %v1220 = vpack.c.b16 %v1157, %v1156
        %v1221 = vpack.c.b16 %v1159, %v1158
        %v1222 = vpack.c.b16 %v1161, %v1160
        %v1223 = vpack.c.b16 %v1163, %v1162
        %v1224 = vpack.c.b16 %v1165, %v1164
        %v1225 = vpack.c.b16 %v1167, %v1166
        %v1226 = vpack.c.b16 %v1169, %v1168
        %v1227 = vpack.c.b16 %v1171, %v1170
        %v1228 = vpack.c.b16 %v1173, %v1172
        %v1229 = vpack.c.b16 %v1175, %v1174
        %v1230 = vpack.c.b16 %v1177, %v1176
        %v1231 = vpack.c.b16 %v1179, %v1178
        %v1232 = vpack.c.b16 %v1181, %v1180
        %v1233 = vpack.c.b16 %v1183, %v1182
        %v1234 = vpack.c.b16 %v1185, %v1184
        %v1235 = vpack.c.b16 %v1187, %v1186
        %v1236 = vpack.c.b16 %v1189, %v1188
        %v1237 = vpack.c.b16 %v1191, %v1190
        %v1238 = vpack.c.b16 %v1193, %v1192
        %v1239 = vpack.c.b16 %v1195, %v1194
        %v1240 = vpack.c.b16 %v1197, %v1196
        %v1241 = vpack.c.b16 %v1199, %v1198
        %v1242 = vpack.c.b16 %v1201, %v1200
        %v1243 = vpack.c.b16 %v1203, %v1202
        %v1244 = vpack.c.b16 %v1205, %v1204
        %v1245 = vpack.c.b16 %v1207, %v1206
        %v1246 = vpack.c.b16 %v1209, %v1208
        %v1247 = vpack.c.b16 %v1211, %v1210
        %v1248 = vpack.c.b16 %v1213, %v1212
        %v1249 = vpack.c.b16 %v1215, %v1214
        %v1250 = vpack.c.b16 %v1217, %v1216
        %v1251 = vpack.c.b16 %v1219, %v1218
        %1284 = vmatprep.subr.bf16.mxu0 0
        %1285 = vmatpush1.bf16.msra.mxu0 %v1227
        %1286 = vmatprep.subr.bf16.mxu0 0
        %1287 = vmatpush1.bf16.msra.mxu0 %v1226
        %1288 = vmatprep.subr.bf16.mxu0 0
        %1289 = vmatpush1.bf16.msra.mxu0 %v1225
        %1290 = vmatprep.subr.bf16.mxu0 0
        %1291 = vmatpush1.bf16.msra.mxu0 %v1224
        %1292 = vmatprep.subr.bf16.mxu0 0
        %1293 = vmatpush1.bf16.msra.mxu0 %v1223
        %1294 = vmatprep.subr.bf16.mxu0 0
        %1295 = vmatpush1.bf16.msra.mxu0 %v1222
        %1296 = vmatprep.subr.bf16.mxu0 0
        %1297 = vmatpush1.bf16.msra.mxu0 %v1221
        %1298 = vmatprep.subr.bf16.mxu0 0
        %1299 = vmatpush1.bf16.msra.mxu0 %v1220
        %1300 = vmatprep.subr.bf16.mxu0 0
        %1301 = vmatpush2.bf16.msra.mxu0 %v1235
        %1302 = vmatprep.subr.bf16.mxu0 0
        %1303 = vmatpush2.bf16.msra.mxu0 %v1234
        %1304 = vmatprep.subr.bf16.mxu0 0
        %1305 = vmatpush2.bf16.msra.mxu0 %v1233
        %1306 = vmatprep.subr.bf16.mxu0 0
        %1307 = vmatpush2.bf16.msra.mxu0 %v1232
        %1308 = vmatprep.subr.bf16.mxu0 0
        %1309 = vmatpush2.bf16.msra.mxu0 %v1231
        %1310 = vmatprep.subr.bf16.mxu0 0
        %1311 = vmatpush2.bf16.msra.mxu0 %v1230
        %1312 = vmatprep.subr.bf16.mxu0 0
        %1313 = vmatpush2.bf16.msra.mxu0 %v1229
        %1314 = vmatprep.subr.bf16.mxu0 0
        %1315 = vmatpush2.bf16.msra.mxu0 %v1228
        %1316 = vmatprep.mubr.bf16.mxu0 %v829
        %1317 = vmatmul.mubr.bf16.gmra.mxu0 %v828
        %v1318 = vpop.f32.mrf.mxu0
        %v1319 = vadd.f32 0.0, %v1318
        %v1320 = vpop.f32.mrf.mxu0
        %v1321 = vpop.f32.mrf.mxu0
        %v1322 = vadd.f32 0.0, %v1321
        %v1323 = vpop.f32.mrf.mxu0
        %1324 = vmatprep.mubr.bf16.mxu0 %v833
        %1325 = vmatmul.mubr.bf16.gmra.mxu0 %v832
        %v1326 = vpop.f32.mrf.mxu0
        %v1327 = vadd.f32 0.0, %v1326
        %v1328 = vpop.f32.mrf.mxu0
        %v1329 = vpop.f32.mrf.mxu0
        %v1330 = vadd.f32 0.0, %v1329
        %v1331 = vpop.f32.mrf.mxu0
        %1332 = vmatprep.mubr.bf16.mxu0 %v837
        %1333 = vmatmul.mubr.bf16.gmra.mxu0 %v836
        %v1334 = vpop.f32.mrf.mxu0
        %v1335 = vadd.f32 0.0, %v1334
        %v1336 = vpop.f32.mrf.mxu0
        %v1337 = vpop.f32.mrf.mxu0
        %v1338 = vadd.f32 0.0, %v1337
        %v1339 = vpop.f32.mrf.mxu0
        %1340 = vmatprep.mubr.bf16.mxu0 %v841
        %1341 = vmatmul.mubr.bf16.gmra.mxu0 %v840
        %v1342 = vpop.f32.mrf.mxu0
        %v1343 = vadd.f32 0.0, %v1342
        %v1344 = vpop.f32.mrf.mxu0
        %v1345 = vpop.f32.mrf.mxu0
        %v1346 = vadd.f32 0.0, %v1345
        %v1347 = vpop.f32.mrf.mxu0
        %1348 = vmatprep.mubr.bf16.mxu0 %v845
        %1349 = vmatmul.mubr.bf16.gmra.mxu0 %v844
        %v1350 = vpop.f32.mrf.mxu0
        %v1351 = vadd.f32 0.0, %v1350
        %v1352 = vpop.f32.mrf.mxu0
        %v1353 = vpop.f32.mrf.mxu0
        %v1354 = vadd.f32 0.0, %v1353
        %v1355 = vpop.f32.mrf.mxu0
        %1356 = vmatprep.mubr.bf16.mxu0 %v849
        %1357 = vmatmul.mubr.bf16.gmra.mxu0 %v848
        %v1358 = vpop.f32.mrf.mxu0
        %v1359 = vadd.f32 0.0, %v1358
        %v1360 = vpop.f32.mrf.mxu0
        %v1361 = vpop.f32.mrf.mxu0
        %v1362 = vadd.f32 0.0, %v1361
        %v1363 = vpop.f32.mrf.mxu0
        %1364 = vmatprep.mubr.bf16.mxu0 %v853
        %1365 = vmatmul.mubr.bf16.gmra.mxu0 %v852
        %v1366 = vpop.f32.mrf.mxu0
        %v1367 = vadd.f32 0.0, %v1366
        %v1368 = vpop.f32.mrf.mxu0
        %v1369 = vpop.f32.mrf.mxu0
        %v1370 = vadd.f32 0.0, %v1369
        %v1371 = vpop.f32.mrf.mxu0
        %1372 = vmatprep.mubr.bf16.mxu0 %v857
        %1373 = vmatmul.mubr.bf16.gmra.mxu0 %v856
        %v1374 = vpop.f32.mrf.mxu0
        %v1375 = vadd.f32 0.0, %v1374
        %v1376 = vpop.f32.mrf.mxu0
        %v1377 = vpop.f32.mrf.mxu0
        %v1378 = vadd.f32 0.0, %v1377
        %v1379 = vpop.f32.mrf.mxu0
        %1380 = vmatprep.mubr.bf16.mxu0 %v861
        %1381 = vmatmul.mubr.bf16.gmra.mxu0 %v860
        %v1382 = vpop.f32.mrf.mxu0
        %v1383 = vadd.f32 0.0, %v1382
        %v1384 = vpop.f32.mrf.mxu0
        %v1385 = vpop.f32.mrf.mxu0
        %v1386 = vadd.f32 0.0, %v1385
        %v1387 = vpop.f32.mrf.mxu0
        %1388 = vmatprep.mubr.bf16.mxu0 %v865
        %1389 = vmatmul.mubr.bf16.gmra.mxu0 %v864
        %v1390 = vpop.f32.mrf.mxu0
        %v1391 = vadd.f32 0.0, %v1390
        %v1392 = vpop.f32.mrf.mxu0
        %v1393 = vpop.f32.mrf.mxu0
        %v1394 = vadd.f32 0.0, %v1393
        %v1395 = vpop.f32.mrf.mxu0
        %1396 = vmatprep.mubr.bf16.mxu0 %v869
        %1397 = vmatmul.mubr.bf16.gmra.mxu0 %v868
        %v1398 = vpop.f32.mrf.mxu0
        %v1399 = vadd.f32 0.0, %v1398
        %v1400 = vpop.f32.mrf.mxu0
        %v1401 = vpop.f32.mrf.mxu0
        %v1402 = vadd.f32 0.0, %v1401
        %v1403 = vpop.f32.mrf.mxu0
        %1404 = vmatprep.mubr.bf16.mxu0 %v873
        %1405 = vmatmul.mubr.bf16.gmra.mxu0 %v872
        %v1406 = vpop.f32.mrf.mxu0
        %v1407 = vadd.f32 0.0, %v1406
        %v1408 = vpop.f32.mrf.mxu0
        %v1409 = vpop.f32.mrf.mxu0
        %v1410 = vadd.f32 0.0, %v1409
        %v1411 = vpop.f32.mrf.mxu0
        %1412 = vmatprep.mubr.bf16.mxu0 %v877
        %1413 = vmatmul.mubr.bf16.gmra.mxu0 %v876
        %v1414 = vpop.f32.mrf.mxu0
        %v1415 = vadd.f32 0.0, %v1414
        %v1416 = vpop.f32.mrf.mxu0
        %v1417 = vpop.f32.mrf.mxu0
        %v1418 = vadd.f32 0.0, %v1417
        %v1419 = vpop.f32.mrf.mxu0
        %1420 = vmatprep.mubr.bf16.mxu0 %v881
        %1421 = vmatmul.mubr.bf16.gmra.mxu0 %v880
        %v1422 = vpop.f32.mrf.mxu0
        %v1423 = vadd.f32 0.0, %v1422
        %v1424 = vpop.f32.mrf.mxu0
        %v1425 = vpop.f32.mrf.mxu0
        %v1426 = vadd.f32 0.0, %v1425
        %v1427 = vpop.f32.mrf.mxu0
        %1428 = vmatprep.mubr.bf16.mxu0 %v885
        %1429 = vmatmul.mubr.bf16.gmra.mxu0 %v884
        %v1430 = vpop.f32.mrf.mxu0
        %v1431 = vadd.f32 0.0, %v1430
        %v1432 = vpop.f32.mrf.mxu0
        %v1433 = vpop.f32.mrf.mxu0
        %v1434 = vadd.f32 0.0, %v1433
        %v1435 = vpop.f32.mrf.mxu0
        %1436 = vmatprep.mubr.bf16.mxu0 %v889
        %1437 = vmatmul.mubr.bf16.gmra.mxu0 %v888
        %v1438 = vpop.f32.mrf.mxu0
        %v1439 = vadd.f32 0.0, %v1438
        %v1440 = vpop.f32.mrf.mxu0
        %v1441 = vpop.f32.mrf.mxu0
        %v1442 = vadd.f32 0.0, %v1441
        %v1443 = vpop.f32.mrf.mxu0
        %1444 = vmatprep.mubr.bf16.mxu0 %v893
        %1445 = vmatmul.mubr.bf16.gmra.mxu0 %v892
        %v1446 = vpop.f32.mrf.mxu0
        %v1447 = vadd.f32 0.0, %v1446
        %v1448 = vpop.f32.mrf.mxu0
        %v1449 = vpop.f32.mrf.mxu0
        %v1450 = vadd.f32 0.0, %v1449
        %v1451 = vpop.f32.mrf.mxu0
        %1452 = vmatprep.mubr.bf16.mxu0 %v897
        %1453 = vmatmul.mubr.bf16.gmra.mxu0 %v896
        %v1454 = vpop.f32.mrf.mxu0
        %v1455 = vadd.f32 0.0, %v1454
        %v1456 = vpop.f32.mrf.mxu0
        %v1457 = vpop.f32.mrf.mxu0
        %v1458 = vadd.f32 0.0, %v1457
        %v1459 = vpop.f32.mrf.mxu0
        %1460 = vmatprep.mubr.bf16.mxu0 %v901
        %1461 = vmatmul.mubr.bf16.gmra.mxu0 %v900
        %v1462 = vpop.f32.mrf.mxu0
        %v1463 = vadd.f32 0.0, %v1462
        %v1464 = vpop.f32.mrf.mxu0
        %v1465 = vpop.f32.mrf.mxu0
        %v1466 = vadd.f32 0.0, %v1465
        %v1467 = vpop.f32.mrf.mxu0
        %1468 = vmatprep.mubr.bf16.mxu0 %v905
        %1469 = vmatmul.mubr.bf16.gmra.mxu0 %v904
        %v1470 = vpop.f32.mrf.mxu0
        %v1471 = vadd.f32 0.0, %v1470
        %v1472 = vpop.f32.mrf.mxu0
        %v1473 = vpop.f32.mrf.mxu0
        %v1474 = vadd.f32 0.0, %v1473
        %v1475 = vpop.f32.mrf.mxu0
        %1476 = vmatprep.mubr.bf16.mxu0 %v909
        %1477 = vmatmul.mubr.bf16.gmra.mxu0 %v908
        %v1478 = vpop.f32.mrf.mxu0
        %v1479 = vadd.f32 0.0, %v1478
        %v1480 = vpop.f32.mrf.mxu0
        %v1481 = vpop.f32.mrf.mxu0
        %v1482 = vadd.f32 0.0, %v1481
        %v1483 = vpop.f32.mrf.mxu0
        %1484 = vmatprep.mubr.bf16.mxu0 %v913
        %1485 = vmatmul.mubr.bf16.gmra.mxu0 %v912
        %v1486 = vpop.f32.mrf.mxu0
        %v1487 = vadd.f32 0.0, %v1486
        %v1488 = vpop.f32.mrf.mxu0
        %v1489 = vpop.f32.mrf.mxu0
        %v1490 = vadd.f32 0.0, %v1489
        %v1491 = vpop.f32.mrf.mxu0
        %1492 = vmatprep.mubr.bf16.mxu0 %v917
        %1493 = vmatmul.mubr.bf16.gmra.mxu0 %v916
        %v1494 = vpop.f32.mrf.mxu0
        %v1495 = vadd.f32 0.0, %v1494
        %v1496 = vpop.f32.mrf.mxu0
        %v1497 = vpop.f32.mrf.mxu0
        %v1498 = vadd.f32 0.0, %v1497
        %v1499 = vpop.f32.mrf.mxu0
        %1500 = vmatprep.mubr.bf16.mxu0 %v921
        %1501 = vmatmul.mubr.bf16.gmra.mxu0 %v920
        %v1502 = vpop.f32.mrf.mxu0
        %v1503 = vadd.f32 0.0, %v1502
        %v1504 = vpop.f32.mrf.mxu0
        %v1505 = vpop.f32.mrf.mxu0
        %v1506 = vadd.f32 0.0, %v1505
        %v1507 = vpop.f32.mrf.mxu0
        %1508 = vmatprep.mubr.bf16.mxu0 %v925
        %1509 = vmatmul.mubr.bf16.gmra.mxu0 %v924
        %v1510 = vpop.f32.mrf.mxu0
        %v1511 = vadd.f32 0.0, %v1510
        %v1512 = vpop.f32.mrf.mxu0
        %v1513 = vpop.f32.mrf.mxu0
        %v1514 = vadd.f32 0.0, %v1513
        %v1515 = vpop.f32.mrf.mxu0
        %1516 = vmatprep.mubr.bf16.mxu0 %v929
        %1517 = vmatmul.mubr.bf16.gmra.mxu0 %v928
        %v1518 = vpop.f32.mrf.mxu0
        %v1519 = vadd.f32 0.0, %v1518
        %v1520 = vpop.f32.mrf.mxu0
        %v1521 = vpop.f32.mrf.mxu0
        %v1522 = vadd.f32 0.0, %v1521
        %v1523 = vpop.f32.mrf.mxu0
        %1524 = vmatprep.mubr.bf16.mxu0 %v933
        %1525 = vmatmul.mubr.bf16.gmra.mxu0 %v932
        %v1526 = vpop.f32.mrf.mxu0
        %v1527 = vadd.f32 0.0, %v1526
        %v1528 = vpop.f32.mrf.mxu0
        %v1529 = vpop.f32.mrf.mxu0
        %v1530 = vadd.f32 0.0, %v1529
        %v1531 = vpop.f32.mrf.mxu0
        %1532 = vmatprep.mubr.bf16.mxu0 %v937
        %1533 = vmatmul.mubr.bf16.gmra.mxu0 %v936
        %v1534 = vpop.f32.mrf.mxu0
        %v1535 = vadd.f32 0.0, %v1534
        %v1536 = vpop.f32.mrf.mxu0
        %v1537 = vpop.f32.mrf.mxu0
        %v1538 = vadd.f32 0.0, %v1537
        %v1539 = vpop.f32.mrf.mxu0
        %1540 = vmatprep.mubr.bf16.mxu0 %v941
        %1541 = vmatmul.mubr.bf16.gmra.mxu0 %v940
        %v1542 = vpop.f32.mrf.mxu0
        %v1543 = vadd.f32 0.0, %v1542
        %v1544 = vpop.f32.mrf.mxu0
        %v1545 = vpop.f32.mrf.mxu0
        %v1546 = vadd.f32 0.0, %v1545
        %v1547 = vpop.f32.mrf.mxu0
        %1548 = vmatprep.mubr.bf16.mxu0 %v945
        %1549 = vmatmul.mubr.bf16.gmra.mxu0 %v944
        %v1550 = vpop.f32.mrf.mxu0
        %v1551 = vadd.f32 0.0, %v1550
        %v1552 = vpop.f32.mrf.mxu0
        %v1553 = vpop.f32.mrf.mxu0
        %v1554 = vadd.f32 0.0, %v1553
        %v1555 = vpop.f32.mrf.mxu0
        %1556 = vmatprep.mubr.bf16.mxu0 %v949
        %1557 = vmatmul.mubr.bf16.gmra.mxu0 %v948
        %v1558 = vpop.f32.mrf.mxu0
        %v1559 = vadd.f32 0.0, %v1558
        %v1560 = vpop.f32.mrf.mxu0
        %v1561 = vpop.f32.mrf.mxu0
        %v1562 = vadd.f32 0.0, %v1561
        %v1563 = vpop.f32.mrf.mxu0
        %1564 = vmatprep.mubr.bf16.mxu0 %v953
        %1565 = vmatmul.mubr.bf16.gmra.mxu0 %v952
        %v1566 = vpop.f32.mrf.mxu0
        %v1567 = vadd.f32 0.0, %v1566
        %v1568 = vpop.f32.mrf.mxu0
        %v1569 = vpop.f32.mrf.mxu0
        %v1570 = vadd.f32 0.0, %v1569
        %v1571 = vpop.f32.mrf.mxu0
        %1572 = vmatprep.mubr.bf16.mxu0 %v957
        %1573 = vmatmul.mubr.bf16.gmra.mxu0 %v956
        %v1574 = vpop.f32.mrf.mxu0
        %v1575 = vadd.f32 0.0, %v1574
        %v1576 = vpop.f32.mrf.mxu0
        %v1577 = vpop.f32.mrf.mxu0
        %v1578 = vadd.f32 0.0, %v1577
        %v1579 = vpop.f32.mrf.mxu0
        %1580 = vdwg.mxu0
        %1581 = vmatprep.subr.bf16.mxu0 0
        %1582 = vmatpush1.bf16.msra.mxu0 %v1243
        %1583 = vmatprep.subr.bf16.mxu0 0
        %1584 = vmatpush1.bf16.msra.mxu0 %v1242
        %1585 = vmatprep.subr.bf16.mxu0 0
        %1586 = vmatpush1.bf16.msra.mxu0 %v1241
        %1587 = vmatprep.subr.bf16.mxu0 0
        %1588 = vmatpush1.bf16.msra.mxu0 %v1240
        %1589 = vmatprep.subr.bf16.mxu0 0
        %1590 = vmatpush1.bf16.msra.mxu0 %v1239
        %1591 = vmatprep.subr.bf16.mxu0 0
        %1592 = vmatpush1.bf16.msra.mxu0 %v1238
        %1593 = vmatprep.subr.bf16.mxu0 0
        %1594 = vmatpush1.bf16.msra.mxu0 %v1237
        %1595 = vmatprep.subr.bf16.mxu0 0
        %1596 = vmatpush1.bf16.msra.mxu0 %v1236
        %1597 = vmatprep.subr.bf16.mxu0 0
        %1598 = vmatpush2.bf16.msra.mxu0 %v1251
        %1599 = vmatprep.subr.bf16.mxu0 0
        %1600 = vmatpush2.bf16.msra.mxu0 %v1250
        %1601 = vmatprep.subr.bf16.mxu0 0
        %1602 = vmatpush2.bf16.msra.mxu0 %v1249
        %1603 = vmatprep.subr.bf16.mxu0 0
        %1604 = vmatpush2.bf16.msra.mxu0 %v1248
        %1605 = vmatprep.subr.bf16.mxu0 0
        %1606 = vmatpush2.bf16.msra.mxu0 %v1247
        %1607 = vmatprep.subr.bf16.mxu0 0
        %1608 = vmatpush2.bf16.msra.mxu0 %v1246
        %1609 = vmatprep.subr.bf16.mxu0 0
        %1610 = vmatpush2.bf16.msra.mxu0 %v1245
        %1611 = vmatprep.subr.bf16.mxu0 0
        %1612 = vmatpush2.bf16.msra.mxu0 %v1244
        %1613 = vmatprep.mubr.bf16.mxu0 %v831
        %1614 = vmatmul.mubr.bf16.gmra.mxu0 %v830
        %v1615 = vpop.f32.mrf.mxu0
        %v1616 = vadd.f32 %v1319, %v1615
        %v1617 = vpop.f32.mrf.mxu0
        %v1618 = vpop.f32.mrf.mxu0
        %v1619 = vadd.f32 %v1322, %v1618
        %v1620 = vpop.f32.mrf.mxu0
        %1621 = vmatprep.mubr.bf16.mxu0 %v835
        %1622 = vmatmul.mubr.bf16.gmra.mxu0 %v834
        %v1623 = vpop.f32.mrf.mxu0
        %v1624 = vadd.f32 %v1327, %v1623
        %v1625 = vpop.f32.mrf.mxu0
        %v1626 = vpop.f32.mrf.mxu0
        %v1627 = vadd.f32 %v1330, %v1626
        %v1628 = vpop.f32.mrf.mxu0
        %1629 = vmatprep.mubr.bf16.mxu0 %v839
        %1630 = vmatmul.mubr.bf16.gmra.mxu0 %v838
        %v1631 = vpop.f32.mrf.mxu0
        %v1632 = vadd.f32 %v1335, %v1631
        %v1633 = vpop.f32.mrf.mxu0
        %v1634 = vpop.f32.mrf.mxu0
        %v1635 = vadd.f32 %v1338, %v1634
        %v1636 = vpop.f32.mrf.mxu0
        %1637 = vmatprep.mubr.bf16.mxu0 %v843
        %1638 = vmatmul.mubr.bf16.gmra.mxu0 %v842
        %v1639 = vpop.f32.mrf.mxu0
        %v1640 = vadd.f32 %v1343, %v1639
        %v1641 = vpop.f32.mrf.mxu0
        %v1642 = vpop.f32.mrf.mxu0
        %v1643 = vadd.f32 %v1346, %v1642
        %v1644 = vpop.f32.mrf.mxu0
        %1645 = vmatprep.mubr.bf16.mxu0 %v847
        %1646 = vmatmul.mubr.bf16.gmra.mxu0 %v846
        %v1647 = vpop.f32.mrf.mxu0
        %v1648 = vadd.f32 %v1351, %v1647
        %v1649 = vpop.f32.mrf.mxu0
        %v1650 = vpop.f32.mrf.mxu0
        %v1651 = vadd.f32 %v1354, %v1650
        %v1652 = vpop.f32.mrf.mxu0
        %1653 = vmatprep.mubr.bf16.mxu0 %v851
        %1654 = vmatmul.mubr.bf16.gmra.mxu0 %v850
        %v1655 = vpop.f32.mrf.mxu0
        %v1656 = vadd.f32 %v1359, %v1655
        %v1657 = vpop.f32.mrf.mxu0
        %v1658 = vpop.f32.mrf.mxu0
        %v1659 = vadd.f32 %v1362, %v1658
        %v1660 = vpop.f32.mrf.mxu0
        %1661 = vmatprep.mubr.bf16.mxu0 %v855
        %1662 = vmatmul.mubr.bf16.gmra.mxu0 %v854
        %v1663 = vpop.f32.mrf.mxu0
        %v1664 = vadd.f32 %v1367, %v1663
        %v1665 = vpop.f32.mrf.mxu0
        %v1666 = vpop.f32.mrf.mxu0
        %v1667 = vadd.f32 %v1370, %v1666
        %v1668 = vpop.f32.mrf.mxu0
        %1669 = vmatprep.mubr.bf16.mxu0 %v859
        %1670 = vmatmul.mubr.bf16.gmra.mxu0 %v858
        %v1671 = vpop.f32.mrf.mxu0
        %v1672 = vadd.f32 %v1375, %v1671
        %v1673 = vpop.f32.mrf.mxu0
        %v1674 = vpop.f32.mrf.mxu0
        %v1675 = vadd.f32 %v1378, %v1674
        %v1676 = vpop.f32.mrf.mxu0
        %1677 = vmatprep.mubr.bf16.mxu0 %v863
        %1678 = vmatmul.mubr.bf16.gmra.mxu0 %v862
        %v1679 = vpop.f32.mrf.mxu0
        %v1680 = vadd.f32 %v1383, %v1679
        %v1681 = vpop.f32.mrf.mxu0
        %v1682 = vpop.f32.mrf.mxu0
        %v1683 = vadd.f32 %v1386, %v1682
        %v1684 = vpop.f32.mrf.mxu0
        %1685 = vmatprep.mubr.bf16.mxu0 %v867
        %1686 = vmatmul.mubr.bf16.gmra.mxu0 %v866
        %v1687 = vpop.f32.mrf.mxu0
        %v1688 = vadd.f32 %v1391, %v1687
        %v1689 = vpop.f32.mrf.mxu0
        %v1690 = vpop.f32.mrf.mxu0
        %v1691 = vadd.f32 %v1394, %v1690
        %v1692 = vpop.f32.mrf.mxu0
        %1693 = vmatprep.mubr.bf16.mxu0 %v871
        %1694 = vmatmul.mubr.bf16.gmra.mxu0 %v870
        %v1695 = vpop.f32.mrf.mxu0
        %v1696 = vadd.f32 %v1399, %v1695
        %v1697 = vpop.f32.mrf.mxu0
        %v1698 = vpop.f32.mrf.mxu0
        %v1699 = vadd.f32 %v1402, %v1698
        %v1700 = vpop.f32.mrf.mxu0
        %1701 = vmatprep.mubr.bf16.mxu0 %v875
        %1702 = vmatmul.mubr.bf16.gmra.mxu0 %v874
        %v1703 = vpop.f32.mrf.mxu0
        %v1704 = vadd.f32 %v1407, %v1703
        %v1705 = vpop.f32.mrf.mxu0
        %v1706 = vpop.f32.mrf.mxu0
        %v1707 = vadd.f32 %v1410, %v1706
        %v1708 = vpop.f32.mrf.mxu0
        %1709 = vmatprep.mubr.bf16.mxu0 %v879
        %1710 = vmatmul.mubr.bf16.gmra.mxu0 %v878
        %v1711 = vpop.f32.mrf.mxu0
        %v1712 = vadd.f32 %v1415, %v1711
        %v1713 = vpop.f32.mrf.mxu0
        %v1714 = vpop.f32.mrf.mxu0
        %v1715 = vadd.f32 %v1418, %v1714
        %v1716 = vpop.f32.mrf.mxu0
        %1717 = vmatprep.mubr.bf16.mxu0 %v883
        %1718 = vmatmul.mubr.bf16.gmra.mxu0 %v882
        %v1719 = vpop.f32.mrf.mxu0
        %v1720 = vadd.f32 %v1423, %v1719
        %v1721 = vpop.f32.mrf.mxu0
        %v1722 = vpop.f32.mrf.mxu0
        %v1723 = vadd.f32 %v1426, %v1722
        %v1724 = vpop.f32.mrf.mxu0
        %1725 = vmatprep.mubr.bf16.mxu0 %v887
        %1726 = vmatmul.mubr.bf16.gmra.mxu0 %v886
        %v1727 = vpop.f32.mrf.mxu0
        %v1728 = vadd.f32 %v1431, %v1727
        %v1729 = vpop.f32.mrf.mxu0
        %v1730 = vpop.f32.mrf.mxu0
        %v1731 = vadd.f32 %v1434, %v1730
        %v1732 = vpop.f32.mrf.mxu0
        %1733 = vmatprep.mubr.bf16.mxu0 %v891
        %1734 = vmatmul.mubr.bf16.gmra.mxu0 %v890
        %v1735 = vpop.f32.mrf.mxu0
        %v1736 = vadd.f32 %v1439, %v1735
        %v1737 = vpop.f32.mrf.mxu0
        %v1738 = vpop.f32.mrf.mxu0
        %v1739 = vadd.f32 %v1442, %v1738
        %v1740 = vpop.f32.mrf.mxu0
        %1741 = vmatprep.mubr.bf16.mxu0 %v895
        %1742 = vmatmul.mubr.bf16.gmra.mxu0 %v894
        %v1743 = vpop.f32.mrf.mxu0
        %v1744 = vadd.f32 %v1447, %v1743
        %v1745 = vpop.f32.mrf.mxu0
        %v1746 = vpop.f32.mrf.mxu0
        %v1747 = vadd.f32 %v1450, %v1746
        %v1748 = vpop.f32.mrf.mxu0
        %1749 = vmatprep.mubr.bf16.mxu0 %v899
        %1750 = vmatmul.mubr.bf16.gmra.mxu0 %v898
        %v1751 = vpop.f32.mrf.mxu0
        %v1752 = vadd.f32 %v1455, %v1751
        %v1753 = vpop.f32.mrf.mxu0
        %v1754 = vpop.f32.mrf.mxu0
        %v1755 = vadd.f32 %v1458, %v1754
        %v1756 = vpop.f32.mrf.mxu0
        %1757 = vmatprep.mubr.bf16.mxu0 %v903
        %1758 = vmatmul.mubr.bf16.gmra.mxu0 %v902
        %v1759 = vpop.f32.mrf.mxu0
        %v1760 = vadd.f32 %v1463, %v1759
        %v1761 = vpop.f32.mrf.mxu0
        %v1762 = vpop.f32.mrf.mxu0
        %v1763 = vadd.f32 %v1466, %v1762
        %v1764 = vpop.f32.mrf.mxu0
        %1765 = vmatprep.mubr.bf16.mxu0 %v907
        %1766 = vmatmul.mubr.bf16.gmra.mxu0 %v906
        %v1767 = vpop.f32.mrf.mxu0
        %v1768 = vadd.f32 %v1471, %v1767
        %v1769 = vpop.f32.mrf.mxu0
        %v1770 = vpop.f32.mrf.mxu0
        %v1771 = vadd.f32 %v1474, %v1770
        %v1772 = vpop.f32.mrf.mxu0
        %1773 = vmatprep.mubr.bf16.mxu0 %v911
        %1774 = vmatmul.mubr.bf16.gmra.mxu0 %v910
        %v1775 = vpop.f32.mrf.mxu0
        %v1776 = vadd.f32 %v1479, %v1775
        %v1777 = vpop.f32.mrf.mxu0
        %v1778 = vpop.f32.mrf.mxu0
        %v1779 = vadd.f32 %v1482, %v1778
        %v1780 = vpop.f32.mrf.mxu0
        %1781 = vmatprep.mubr.bf16.mxu0 %v915
        %1782 = vmatmul.mubr.bf16.gmra.mxu0 %v914
        %v1783 = vpop.f32.mrf.mxu0
        %v1784 = vadd.f32 %v1487, %v1783
        %v1785 = vpop.f32.mrf.mxu0
        %v1786 = vpop.f32.mrf.mxu0
        %v1787 = vadd.f32 %v1490, %v1786
        %v1788 = vpop.f32.mrf.mxu0
        %1789 = vmatprep.mubr.bf16.mxu0 %v919
        %1790 = vmatmul.mubr.bf16.gmra.mxu0 %v918
        %v1791 = vpop.f32.mrf.mxu0
        %v1792 = vadd.f32 %v1495, %v1791
        %v1793 = vpop.f32.mrf.mxu0
        %v1794 = vpop.f32.mrf.mxu0
        %v1795 = vadd.f32 %v1498, %v1794
        %v1796 = vpop.f32.mrf.mxu0
        %1797 = vmatprep.mubr.bf16.mxu0 %v923
        %1798 = vmatmul.mubr.bf16.gmra.mxu0 %v922
        %v1799 = vpop.f32.mrf.mxu0
        %v1800 = vadd.f32 %v1503, %v1799
        %v1801 = vpop.f32.mrf.mxu0
        %v1802 = vpop.f32.mrf.mxu0
        %v1803 = vadd.f32 %v1506, %v1802
        %v1804 = vpop.f32.mrf.mxu0
        %1805 = vmatprep.mubr.bf16.mxu0 %v927
        %1806 = vmatmul.mubr.bf16.gmra.mxu0 %v926
        %v1807 = vpop.f32.mrf.mxu0
        %v1808 = vadd.f32 %v1511, %v1807
        %v1809 = vpop.f32.mrf.mxu0
        %v1810 = vpop.f32.mrf.mxu0
        %v1811 = vadd.f32 %v1514, %v1810
        %v1812 = vpop.f32.mrf.mxu0
        %1813 = vmatprep.mubr.bf16.mxu0 %v931
        %1814 = vmatmul.mubr.bf16.gmra.mxu0 %v930
        %v1815 = vpop.f32.mrf.mxu0
        %v1816 = vadd.f32 %v1519, %v1815
        %v1817 = vpop.f32.mrf.mxu0
        %v1818 = vpop.f32.mrf.mxu0
        %v1819 = vadd.f32 %v1522, %v1818
        %v1820 = vpop.f32.mrf.mxu0
        %1821 = vmatprep.mubr.bf16.mxu0 %v935
        %1822 = vmatmul.mubr.bf16.gmra.mxu0 %v934
        %v1823 = vpop.f32.mrf.mxu0
        %v1824 = vadd.f32 %v1527, %v1823
        %v1825 = vpop.f32.mrf.mxu0
        %v1826 = vpop.f32.mrf.mxu0
        %v1827 = vadd.f32 %v1530, %v1826
        %v1828 = vpop.f32.mrf.mxu0
        %1829 = vmatprep.mubr.bf16.mxu0 %v939
        %1830 = vmatmul.mubr.bf16.gmra.mxu0 %v938
        %v1831 = vpop.f32.mrf.mxu0
        %v1832 = vadd.f32 %v1535, %v1831
        %v1833 = vpop.f32.mrf.mxu0
        %v1834 = vpop.f32.mrf.mxu0
        %v1835 = vadd.f32 %v1538, %v1834
        %v1836 = vpop.f32.mrf.mxu0
        %1837 = vmatprep.mubr.bf16.mxu0 %v943
        %1838 = vmatmul.mubr.bf16.gmra.mxu0 %v942
        %v1839 = vpop.f32.mrf.mxu0
        %v1840 = vadd.f32 %v1543, %v1839
        %v1841 = vpop.f32.mrf.mxu0
        %v1842 = vpop.f32.mrf.mxu0
        %v1843 = vadd.f32 %v1546, %v1842
        %v1844 = vpop.f32.mrf.mxu0
        %1845 = vmatprep.mubr.bf16.mxu0 %v947
        %1846 = vmatmul.mubr.bf16.gmra.mxu0 %v946
        %v1847 = vpop.f32.mrf.mxu0
        %v1848 = vadd.f32 %v1551, %v1847
        %v1849 = vpop.f32.mrf.mxu0
        %v1850 = vpop.f32.mrf.mxu0
        %v1851 = vadd.f32 %v1554, %v1850
        %v1852 = vpop.f32.mrf.mxu0
        %1853 = vmatprep.mubr.bf16.mxu0 %v951
        %1854 = vmatmul.mubr.bf16.gmra.mxu0 %v950
        %v1855 = vpop.f32.mrf.mxu0
        %v1856 = vadd.f32 %v1559, %v1855
        %v1857 = vpop.f32.mrf.mxu0
        %v1858 = vpop.f32.mrf.mxu0
        %v1859 = vadd.f32 %v1562, %v1858
        %v1860 = vpop.f32.mrf.mxu0
        %1861 = vmatprep.mubr.bf16.mxu0 %v955
        %1862 = vmatmul.mubr.bf16.gmra.mxu0 %v954
        %v1863 = vpop.f32.mrf.mxu0
        %v1864 = vadd.f32 %v1567, %v1863
        %v1865 = vpop.f32.mrf.mxu0
        %v1866 = vpop.f32.mrf.mxu0
        %v1867 = vadd.f32 %v1570, %v1866
        %v1868 = vpop.f32.mrf.mxu0
        %1869 = vmatprep.mubr.bf16.mxu0 %v959
        %1870 = vmatmul.mubr.bf16.gmra.mxu0 %v958
        %v1871 = vpop.f32.mrf.mxu0
        %v1872 = vadd.f32 %v1575, %v1871
        %v1873 = vpop.f32.mrf.mxu0
        %v1874 = vpop.f32.mrf.mxu0
        %v1875 = vadd.f32 %v1578, %v1874
        %v1876 = vpop.f32.mrf.mxu0
        %1877 = vdwg.mxu0
        %v1878 = vmul.f32 %v1616, %v1616
        %v1879 = vmul.f32 %v1619, %v1619
        %v1880 = vmul.f32 %v1624, %v1624
        %v1881 = vmul.f32 %v1627, %v1627
        %v1882 = vmul.f32 %v1632, %v1632
        %v1883 = vmul.f32 %v1635, %v1635
        %v1884 = vmul.f32 %v1640, %v1640
        %v1885 = vmul.f32 %v1643, %v1643
        %v1886 = vmul.f32 %v1648, %v1648
        %v1887 = vmul.f32 %v1651, %v1651
        %v1888 = vmul.f32 %v1656, %v1656
        %v1889 = vmul.f32 %v1659, %v1659
        %v1890 = vmul.f32 %v1664, %v1664
        %v1891 = vmul.f32 %v1667, %v1667
        %v1892 = vmul.f32 %v1672, %v1672
        %v1893 = vmul.f32 %v1675, %v1675
        %v1894 = vmul.f32 %v1680, %v1680
        %v1895 = vmul.f32 %v1683, %v1683
        %v1896 = vmul.f32 %v1688, %v1688
        %v1897 = vmul.f32 %v1691, %v1691
        %v1898 = vmul.f32 %v1696, %v1696
        %v1899 = vmul.f32 %v1699, %v1699
        %v1900 = vmul.f32 %v1704, %v1704
        %v1901 = vmul.f32 %v1707, %v1707
        %v1902 = vmul.f32 %v1712, %v1712
        %v1903 = vmul.f32 %v1715, %v1715
        %v1904 = vmul.f32 %v1720, %v1720
        %v1905 = vmul.f32 %v1723, %v1723
        %v1906 = vmul.f32 %v1728, %v1728
        %v1907 = vmul.f32 %v1731, %v1731
        %v1908 = vmul.f32 %v1736, %v1736
        %v1909 = vmul.f32 %v1739, %v1739
        %v1910 = vmul.f32 %v1744, %v1744
        %v1911 = vmul.f32 %v1747, %v1747
        %v1912 = vmul.f32 %v1752, %v1752
        %v1913 = vmul.f32 %v1755, %v1755
        %v1914 = vmul.f32 %v1760, %v1760
        %v1915 = vmul.f32 %v1763, %v1763
        %v1916 = vmul.f32 %v1768, %v1768
        %v1917 = vmul.f32 %v1771, %v1771
        %v1918 = vmul.f32 %v1776, %v1776
        %v1919 = vmul.f32 %v1779, %v1779
        %v1920 = vmul.f32 %v1784, %v1784
        %v1921 = vmul.f32 %v1787, %v1787
        %v1922 = vmul.f32 %v1792, %v1792
        %v1923 = vmul.f32 %v1795, %v1795
        %v1924 = vmul.f32 %v1800, %v1800
        %v1925 = vmul.f32 %v1803, %v1803
        %v1926 = vmul.f32 %v1808, %v1808
        %v1927 = vmul.f32 %v1811, %v1811
        %v1928 = vmul.f32 %v1816, %v1816
        %v1929 = vmul.f32 %v1819, %v1819
        %v1930 = vmul.f32 %v1824, %v1824
        %v1931 = vmul.f32 %v1827, %v1827
        %v1932 = vmul.f32 %v1832, %v1832
        %v1933 = vmul.f32 %v1835, %v1835
        %v1934 = vmul.f32 %v1840, %v1840
        %v1935 = vmul.f32 %v1843, %v1843
        %v1936 = vmul.f32 %v1848, %v1848
        %v1937 = vmul.f32 %v1851, %v1851
        %v1938 = vmul.f32 %v1856, %v1856
        %v1939 = vmul.f32 %v1859, %v1859
        %v1940 = vmul.f32 %v1864, %v1864
        %v1941 = vmul.f32 %v1867, %v1867
        %v1942 = vmul.f32 %v1872, %v1872
        %v1943 = vmul.f32 %v1875, %v1875
        %v1944 = vadd.f32 %v1878, %v1911
        %v1945 = vadd.f32 %v1879, %v1912
        %v1946 = vadd.f32 %v1880, %v1913
        %v1947 = vadd.f32 %v1881, %v1914
        %v1948 = vadd.f32 %v1882, %v1915
        %v1949 = vadd.f32 %v1883, %v1916
        %v1950 = vadd.f32 %v1884, %v1917
        %v1951 = vadd.f32 %v1885, %v1918
        %v1952 = vadd.f32 %v1886, %v1919
        %v1953 = vadd.f32 %v1887, %v1920
        %v1954 = vadd.f32 %v1888, %v1921
        %v1955 = vadd.f32 %v1889, %v1922
        %v1956 = vadd.f32 %v1890, %v1923
        %v1957 = vadd.f32 %v1891, %v1924
        %v1958 = vadd.f32 %v1892, %v1925
        %v1959 = vadd.f32 %v1893, %v1926
        %v1960 = vadd.f32 %v1894, %v1927
        %v1961 = vadd.f32 %v1895, %v1928
        %v1962 = vadd.f32 %v1896, %v1929
        %v1963 = vadd.f32 %v1897, %v1930
        %v1964 = vadd.f32 %v1898, %v1931
        %v1965 = vadd.f32 %v1899, %v1932
        %v1966 = vadd.f32 %v1900, %v1933
        %v1967 = vadd.f32 %v1901, %v1934
        %v1968 = vadd.f32 %v1902, %v1935
        %v1969 = vadd.f32 %v1903, %v1936
        %v1970 = vadd.f32 %v1904, %v1937
        %v1971 = vadd.f32 %v1905, %v1938
        %v1972 = vadd.f32 %v1906, %v1939
        %v1973 = vadd.f32 %v1907, %v1940
        %v1974 = vadd.f32 %v1908, %v1941
        %v1975 = vadd.f32 %v1909, %v1942
        %v1976 = vadd.f32 %v1910, %v1943
        %v1977 = vrsqrt.pop %v1944
        %v1978 = vmul.f32 %v1944, %v1977
        %vm1979 = vcmp.eq.f32.partialorder %v1944, inf
        %v1980 = vsel %vm1979, %v1944, %v1978
        %vm1981 = vcmp.eq.f32.partialorder %v1944, 0.0
        %v1982 = vand.u32 %v1944, 2147483648
        %v1983 = vsel %vm1981, %v1982, %v1980
        %v1984 = vrsqrt.pop %v1945
        %v1985 = vmul.f32 %v1945, %v1984
        %vm1986 = vcmp.eq.f32.partialorder %v1945, inf
        %v1987 = vsel %vm1986, %v1945, %v1985
        %vm1988 = vcmp.eq.f32.partialorder %v1945, 0.0
        %v1989 = vand.u32 %v1945, 2147483648
        %v1990 = vsel %vm1988, %v1989, %v1987
        %v1991 = vrsqrt.pop %v1946
        %v1992 = vmul.f32 %v1946, %v1991
        %vm1993 = vcmp.eq.f32.partialorder %v1946, inf
        %v1994 = vsel %vm1993, %v1946, %v1992
        %vm1995 = vcmp.eq.f32.partialorder %v1946, 0.0
        %v1996 = vand.u32 %v1946, 2147483648
        %v1997 = vsel %vm1995, %v1996, %v1994
        %v1998 = vrsqrt.pop %v1947
        %v1999 = vmul.f32 %v1947, %v1998
        %vm2000 = vcmp.eq.f32.partialorder %v1947, inf
        %v2001 = vsel %vm2000, %v1947, %v1999
        %vm2002 = vcmp.eq.f32.partialorder %v1947, 0.0
        %v2003 = vand.u32 %v1947, 2147483648
        %v2004 = vsel %vm2002, %v2003, %v2001
        %v2005 = vrsqrt.pop %v1948
        %v2006 = vmul.f32 %v1948, %v2005
        %vm2007 = vcmp.eq.f32.partialorder %v1948, inf
        %v2008 = vsel %vm2007, %v1948, %v2006
        %vm2009 = vcmp.eq.f32.partialorder %v1948, 0.0
        %v2010 = vand.u32 %v1948, 2147483648
        %v2011 = vsel %vm2009, %v2010, %v2008
        %v2012 = vrsqrt.pop %v1949
        %v2013 = vmul.f32 %v1949, %v2012
        %vm2014 = vcmp.eq.f32.partialorder %v1949, inf
        %v2015 = vsel %vm2014, %v1949, %v2013
        %vm2016 = vcmp.eq.f32.partialorder %v1949, 0.0
        %v2017 = vand.u32 %v1949, 2147483648
        %v2018 = vsel %vm2016, %v2017, %v2015
        %v2019 = vrsqrt.pop %v1950
        %v2020 = vmul.f32 %v1950, %v2019
        %vm2021 = vcmp.eq.f32.partialorder %v1950, inf
        %v2022 = vsel %vm2021, %v1950, %v2020
        %vm2023 = vcmp.eq.f32.partialorder %v1950, 0.0
        %v2024 = vand.u32 %v1950, 2147483648
        %v2025 = vsel %vm2023, %v2024, %v2022
        %v2026 = vrsqrt.pop %v1951
        %v2027 = vmul.f32 %v1951, %v2026
        %vm2028 = vcmp.eq.f32.partialorder %v1951, inf
        %v2029 = vsel %vm2028, %v1951, %v2027
        %vm2030 = vcmp.eq.f32.partialorder %v1951, 0.0
        %v2031 = vand.u32 %v1951, 2147483648
        %v2032 = vsel %vm2030, %v2031, %v2029
        %v2033 = vrsqrt.pop %v1952
        %v2034 = vmul.f32 %v1952, %v2033
        %vm2035 = vcmp.eq.f32.partialorder %v1952, inf
        %v2036 = vsel %vm2035, %v1952, %v2034
        %vm2037 = vcmp.eq.f32.partialorder %v1952, 0.0
        %v2038 = vand.u32 %v1952, 2147483648
        %v2039 = vsel %vm2037, %v2038, %v2036
        %v2040 = vrsqrt.pop %v1953
        %v2041 = vmul.f32 %v1953, %v2040
        %vm2042 = vcmp.eq.f32.partialorder %v1953, inf
        %v2043 = vsel %vm2042, %v1953, %v2041
        %vm2044 = vcmp.eq.f32.partialorder %v1953, 0.0
        %v2045 = vand.u32 %v1953, 2147483648
        %v2046 = vsel %vm2044, %v2045, %v2043
        %v2047 = vrsqrt.pop %v1954
        %v2048 = vmul.f32 %v1954, %v2047
        %vm2049 = vcmp.eq.f32.partialorder %v1954, inf
        %v2050 = vsel %vm2049, %v1954, %v2048
        %vm2051 = vcmp.eq.f32.partialorder %v1954, 0.0
        %v2052 = vand.u32 %v1954, 2147483648
        %v2053 = vsel %vm2051, %v2052, %v2050
        %v2054 = vrsqrt.pop %v1955
        %v2055 = vmul.f32 %v1955, %v2054
        %vm2056 = vcmp.eq.f32.partialorder %v1955, inf
        %v2057 = vsel %vm2056, %v1955, %v2055
        %vm2058 = vcmp.eq.f32.partialorder %v1955, 0.0
        %v2059 = vand.u32 %v1955, 2147483648
        %v2060 = vsel %vm2058, %v2059, %v2057
        %v2061 = vrsqrt.pop %v1956
        %v2062 = vmul.f32 %v1956, %v2061
        %vm2063 = vcmp.eq.f32.partialorder %v1956, inf
        %v2064 = vsel %vm2063, %v1956, %v2062
        %vm2065 = vcmp.eq.f32.partialorder %v1956, 0.0
        %v2066 = vand.u32 %v1956, 2147483648
        %v2067 = vsel %vm2065, %v2066, %v2064
        %v2068 = vrsqrt.pop %v1957
        %v2069 = vmul.f32 %v1957, %v2068
        %vm2070 = vcmp.eq.f32.partialorder %v1957, inf
        %v2071 = vsel %vm2070, %v1957, %v2069
        %vm2072 = vcmp.eq.f32.partialorder %v1957, 0.0
        %v2073 = vand.u32 %v1957, 2147483648
        %v2074 = vsel %vm2072, %v2073, %v2071
        %v2075 = vrsqrt.pop %v1958
        %v2076 = vmul.f32 %v1958, %v2075
        %vm2077 = vcmp.eq.f32.partialorder %v1958, inf
        %v2078 = vsel %vm2077, %v1958, %v2076
        %vm2079 = vcmp.eq.f32.partialorder %v1958, 0.0
        %v2080 = vand.u32 %v1958, 2147483648
        %v2081 = vsel %vm2079, %v2080, %v2078
        %v2082 = vrsqrt.pop %v1959
        %v2083 = vmul.f32 %v1959, %v2082
        %vm2084 = vcmp.eq.f32.partialorder %v1959, inf
        %v2085 = vsel %vm2084, %v1959, %v2083
        %vm2086 = vcmp.eq.f32.partialorder %v1959, 0.0
        %v2087 = vand.u32 %v1959, 2147483648
        %v2088 = vsel %vm2086, %v2087, %v2085
        %v2089 = vrsqrt.pop %v1960
        %v2090 = vmul.f32 %v1960, %v2089
        %vm2091 = vcmp.eq.f32.partialorder %v1960, inf
        %v2092 = vsel %vm2091, %v1960, %v2090
        %vm2093 = vcmp.eq.f32.partialorder %v1960, 0.0
        %v2094 = vand.u32 %v1960, 2147483648
        %v2095 = vsel %vm2093, %v2094, %v2092
        %v2096 = vrsqrt.pop %v1961
        %v2097 = vmul.f32 %v1961, %v2096
        %vm2098 = vcmp.eq.f32.partialorder %v1961, inf
        %v2099 = vsel %vm2098, %v1961, %v2097
        %vm2100 = vcmp.eq.f32.partialorder %v1961, 0.0
        %v2101 = vand.u32 %v1961, 2147483648
        %v2102 = vsel %vm2100, %v2101, %v2099
        %v2103 = vrsqrt.pop %v1962
        %v2104 = vmul.f32 %v1962, %v2103
        %vm2105 = vcmp.eq.f32.partialorder %v1962, inf
        %v2106 = vsel %vm2105, %v1962, %v2104
        %vm2107 = vcmp.eq.f32.partialorder %v1962, 0.0
        %v2108 = vand.u32 %v1962, 2147483648
        %v2109 = vsel %vm2107, %v2108, %v2106
        %v2110 = vrsqrt.pop %v1963
        %v2111 = vmul.f32 %v1963, %v2110
        %vm2112 = vcmp.eq.f32.partialorder %v1963, inf
        %v2113 = vsel %vm2112, %v1963, %v2111
        %vm2114 = vcmp.eq.f32.partialorder %v1963, 0.0
        %v2115 = vand.u32 %v1963, 2147483648
        %v2116 = vsel %vm2114, %v2115, %v2113
        %v2117 = vrsqrt.pop %v1964
        %v2118 = vmul.f32 %v1964, %v2117
        %vm2119 = vcmp.eq.f32.partialorder %v1964, inf
        %v2120 = vsel %vm2119, %v1964, %v2118
        %vm2121 = vcmp.eq.f32.partialorder %v1964, 0.0
        %v2122 = vand.u32 %v1964, 2147483648
        %v2123 = vsel %vm2121, %v2122, %v2120
        %v2124 = vrsqrt.pop %v1965
        %v2125 = vmul.f32 %v1965, %v2124
        %vm2126 = vcmp.eq.f32.partialorder %v1965, inf
        %v2127 = vsel %vm2126, %v1965, %v2125
        %vm2128 = vcmp.eq.f32.partialorder %v1965, 0.0
        %v2129 = vand.u32 %v1965, 2147483648
        %v2130 = vsel %vm2128, %v2129, %v2127
        %v2131 = vrsqrt.pop %v1966
        %v2132 = vmul.f32 %v1966, %v2131
        %vm2133 = vcmp.eq.f32.partialorder %v1966, inf
        %v2134 = vsel %vm2133, %v1966, %v2132
        %vm2135 = vcmp.eq.f32.partialorder %v1966, 0.0
        %v2136 = vand.u32 %v1966, 2147483648
        %v2137 = vsel %vm2135, %v2136, %v2134
        %v2138 = vrsqrt.pop %v1967
        %v2139 = vmul.f32 %v1967, %v2138
        %vm2140 = vcmp.eq.f32.partialorder %v1967, inf
        %v2141 = vsel %vm2140, %v1967, %v2139
        %vm2142 = vcmp.eq.f32.partialorder %v1967, 0.0
        %v2143 = vand.u32 %v1967, 2147483648
        %v2144 = vsel %vm2142, %v2143, %v2141
        %v2145 = vrsqrt.pop %v1968
        %v2146 = vmul.f32 %v1968, %v2145
        %vm2147 = vcmp.eq.f32.partialorder %v1968, inf
        %v2148 = vsel %vm2147, %v1968, %v2146
        %vm2149 = vcmp.eq.f32.partialorder %v1968, 0.0
        %v2150 = vand.u32 %v1968, 2147483648
        %v2151 = vsel %vm2149, %v2150, %v2148
        %v2152 = vrsqrt.pop %v1969
        %v2153 = vmul.f32 %v1969, %v2152
        %vm2154 = vcmp.eq.f32.partialorder %v1969, inf
        %v2155 = vsel %vm2154, %v1969, %v2153
        %vm2156 = vcmp.eq.f32.partialorder %v1969, 0.0
        %v2157 = vand.u32 %v1969, 2147483648
        %v2158 = vsel %vm2156, %v2157, %v2155
        %v2159 = vrsqrt.pop %v1970
        %v2160 = vmul.f32 %v1970, %v2159
        %vm2161 = vcmp.eq.f32.partialorder %v1970, inf
        %v2162 = vsel %vm2161, %v1970, %v2160
        %vm2163 = vcmp.eq.f32.partialorder %v1970, 0.0
        %v2164 = vand.u32 %v1970, 2147483648
        %v2165 = vsel %vm2163, %v2164, %v2162
        %v2166 = vrsqrt.pop %v1971
        %v2167 = vmul.f32 %v1971, %v2166
        %vm2168 = vcmp.eq.f32.partialorder %v1971, inf
        %v2169 = vsel %vm2168, %v1971, %v2167
        %vm2170 = vcmp.eq.f32.partialorder %v1971, 0.0
        %v2171 = vand.u32 %v1971, 2147483648
        %v2172 = vsel %vm2170, %v2171, %v2169
        %v2173 = vrsqrt.pop %v1972
        %v2174 = vmul.f32 %v1972, %v2173
        %vm2175 = vcmp.eq.f32.partialorder %v1972, inf
        %v2176 = vsel %vm2175, %v1972, %v2174
        %vm2177 = vcmp.eq.f32.partialorder %v1972, 0.0
        %v2178 = vand.u32 %v1972, 2147483648
        %v2179 = vsel %vm2177, %v2178, %v2176
        %v2180 = vrsqrt.pop %v1973
        %v2181 = vmul.f32 %v1973, %v2180
        %vm2182 = vcmp.eq.f32.partialorder %v1973, inf
        %v2183 = vsel %vm2182, %v1973, %v2181
        %vm2184 = vcmp.eq.f32.partialorder %v1973, 0.0
        %v2185 = vand.u32 %v1973, 2147483648
        %v2186 = vsel %vm2184, %v2185, %v2183
        %v2187 = vrsqrt.pop %v1974
        %v2188 = vmul.f32 %v1974, %v2187
        %vm2189 = vcmp.eq.f32.partialorder %v1974, inf
        %v2190 = vsel %vm2189, %v1974, %v2188
        %vm2191 = vcmp.eq.f32.partialorder %v1974, 0.0
        %v2192 = vand.u32 %v1974, 2147483648
        %v2193 = vsel %vm2191, %v2192, %v2190
        %v2194 = vrsqrt.pop %v1975
        %v2195 = vmul.f32 %v1975, %v2194
        %vm2196 = vcmp.eq.f32.partialorder %v1975, inf
        %v2197 = vsel %vm2196, %v1975, %v2195
        %vm2198 = vcmp.eq.f32.partialorder %v1975, 0.0
        %v2199 = vand.u32 %v1975, 2147483648
        %v2200 = vsel %vm2198, %v2199, %v2197
        %v2201 = vrsqrt.pop %v1976
        %v2202 = vmul.f32 %v1976, %v2201
        %vm2203 = vcmp.eq.f32.partialorder %v1976, inf
        %v2204 = vsel %vm2203, %v1976, %v2202
        %vm2205 = vcmp.eq.f32.partialorder %v1976, 0.0
        %v2206 = vand.u32 %v1976, 2147483648
        %v2207 = vsel %vm2205, %v2206, %v2204
        %v2208 = vld [vmem:[#allocation7] sm:$0xff]
        %v2209 = vld [vmem:[#allocation7 + $0x8] sm:$0xf]
        %v2210 = vld [vmem:[#allocation7 + $0xc] sm:$0xff]
        %v2211 = vld [vmem:[#allocation7 + $0x14] sm:$0xf]
        %v2212 = vld [vmem:[#allocation7 + $0x18] sm:$0xff]
        %v2213 = vld [vmem:[#allocation7 + $0x20] sm:$0xf]
        %v2214 = vld [vmem:[#allocation7 + $0x24] sm:$0xff]
        %v2215 = vld [vmem:[#allocation7 + $0x2c] sm:$0xf]
        %v2216 = vld [vmem:[#allocation7 + $0x30] sm:$0xff]
        %v2217 = vld [vmem:[#allocation7 + $0x38] sm:$0xf]
        %v2218 = vpack.c.bf16 %v1990, %v1983
        %v2219 = vpack.c.bf16 %v2004, %v1997
        %v2220 = vpack.c.bf16 %v2018, %v2011
        %v2221 = vpack.c.bf16 %v2032, %v2025
        %v2222 = vpack.c.bf16 %v2046, %v2039
        %v2223 = vpack.c.bf16 %v2060, %v2053
        %v2224 = vpack.c.bf16 %v2074, %v2067
        %v2225 = vpack.c.bf16 %v2088, %v2081
        %v2226 = vpack.c.bf16 %v2102, %v2095
        %v2227 = vpack.c.bf16 %v2116, %v2109
        %v2228 = vpack.c.bf16 %v2130, %v2123
        %v2229 = vpack.c.bf16 %v2144, %v2137
        %v2230 = vpack.c.bf16 %v2158, %v2151
        %v2231 = vpack.c.bf16 %v2172, %v2165
        %v2232 = vpack.c.bf16 %v2186, %v2179
        %v2233 = vpack.c.bf16 %v2200, %v2193
        %v2234 = vpack.c.bf16 %v2207, %v2207
        %v2245 = vunpack.c.l.b16 %v2208
        %v2246 = vunpack.c.h.b16 %v2208
        %v2247 = vunpack.c.l.b16 %v2209
        %v2248 = vunpack.c.l.b16 %v2210
        %v2249 = vunpack.c.h.b16 %v2210
        %v2250 = vunpack.c.l.b16 %v2211
        %v2251 = vunpack.c.l.b16 %v2212
        %v2252 = vunpack.c.h.b16 %v2212
        %v2253 = vunpack.c.l.b16 %v2213
        %v2254 = vunpack.c.l.b16 %v2214
        %v2255 = vunpack.c.h.b16 %v2214
        %v2256 = vunpack.c.l.b16 %v2215
        %v2257 = vunpack.c.l.b16 %v2216
        %v2258 = vunpack.c.h.b16 %v2216
        %v2259 = vunpack.c.l.b16 %v2217
        %v2260 = vpack.c.b16 %v2248, %v2245
        %v2261 = vpack.c.b16 %v2249, %v2246
        %v2262 = vpack.c.b16 %v2250, %v2247
        %v2263 = vpack.c.b16 %v2254, %v2251
        %v2264 = vpack.c.b16 %v2255, %v2252
        %v2265 = vpack.c.b16 %v2256, %v2253
        %v2266 = vpack.c.b16 %v2257, %v2257
        %v2267 = vpack.c.b16 %v2258, %v2258
        %v2268 = vpack.c.b16 %v2259, %v2259
        %vm2275 = vcmask 64512
        %v2277 = vsel %vm2275, %v2262, 0
        %v2280 = vsel %vm2275, %v2265, 0
        %v2283 = vsel %vm2275, %v2268, 0
        %vm2285 = vcmask 1043456
        %v2287 = vsel %vm2285, %v2234, 0
        %2289 = vmatprep.subr.bf16.mxu0 0
        %2290 = vmatpush1.bf16.msra.mxu0 %v2225
        %2291 = vmatprep.subr.bf16.mxu0 0
        %2292 = vmatpush1.bf16.msra.mxu0 %v2224
        %2293 = vmatprep.subr.bf16.mxu0 0
        %2294 = vmatpush1.bf16.msra.mxu0 %v2223
        %2295 = vmatprep.subr.bf16.mxu0 0
        %2296 = vmatpush1.bf16.msra.mxu0 %v2222
        %2297 = vmatprep.subr.bf16.mxu0 0
        %2298 = vmatpush1.bf16.msra.mxu0 %v2221
        %2299 = vmatprep.subr.bf16.mxu0 0
        %2300 = vmatpush1.bf16.msra.mxu0 %v2220
        %2301 = vmatprep.subr.bf16.mxu0 0
        %2302 = vmatpush1.bf16.msra.mxu0 %v2219
        %2303 = vmatprep.subr.bf16.mxu0 0
        %2304 = vmatpush1.bf16.msra.mxu0 %v2218
        %2305 = vmatprep.subr.bf16.mxu0 0
        %2306 = vmatpush2.bf16.msra.mxu0 %v2233
        %2307 = vmatprep.subr.bf16.mxu0 0
        %2308 = vmatpush2.bf16.msra.mxu0 %v2232
        %2309 = vmatprep.subr.bf16.mxu0 0
        %2310 = vmatpush2.bf16.msra.mxu0 %v2231
        %2311 = vmatprep.subr.bf16.mxu0 0
        %2312 = vmatpush2.bf16.msra.mxu0 %v2230
        %2313 = vmatprep.subr.bf16.mxu0 0
        %2314 = vmatpush2.bf16.msra.mxu0 %v2229
        %2315 = vmatprep.subr.bf16.mxu0 0
        %2316 = vmatpush2.bf16.msra.mxu0 %v2228
        %2317 = vmatprep.subr.bf16.mxu0 0
        %2318 = vmatpush2.bf16.msra.mxu0 %v2227
        %2319 = vmatprep.subr.bf16.mxu0 0
        %2320 = vmatpush2.bf16.msra.mxu0 %v2226
        %2321 = vmatprep.mubr.bf16.mxu0 %v2261
        %2322 = vmatmul.mubr.bf16.gmra.mxu0 %v2260
        %v2323 = vpop.f32.mrf.mxu0
        %v2324 = vadd.f32 0.0, %v2323
        %v2325 = vpop.f32.mrf.mxu0
        %v2326 = vpop.f32.mrf.mxu0
        %v2327 = vadd.f32 0.0, %v2326
        %v2328 = vpop.f32.mrf.mxu0
        %2329 = vmatprep.mubr.bf16.mxu0 %v2264
        %2330 = vmatmul.mubr.bf16.gmra.mxu0 %v2263
        %v2331 = vpop.f32.mrf.mxu0
        %v2332 = vadd.f32 0.0, %v2331
        %v2333 = vpop.f32.mrf.mxu0
        %v2334 = vpop.f32.mrf.mxu0
        %v2335 = vadd.f32 0.0, %v2334
        %v2336 = vpop.f32.mrf.mxu0
        %2337 = vmatprep.mubr.bf16.mxu0 %v2267
        %2338 = vmatmul.mubr.bf16.gmra.mxu0 %v2266
        %v2339 = vpop.f32.mrf.mxu0
        %v2340 = vadd.f32 0.0, %v2339
        %v2341 = vpop.f32.mrf.mxu0
        %v2342 = vpop.f32.mrf.mxu0
        %v2343 = vpop.f32.mrf.mxu0
        %2344 = vdwg.mxu0
        %2345 = vmatprep.subr.bf16.mxu0 0
        %2346 = vmatpush1.bf16.msra.mxu0 0
        %2347 = vmatprep.subr.bf16.mxu0 0
        %2348 = vmatpush1.bf16.msra.mxu0 0
        %2349 = vmatprep.subr.bf16.mxu0 0
        %2350 = vmatpush1.bf16.msra.mxu0 0
        %2351 = vmatprep.subr.bf16.mxu0 0
        %2352 = vmatpush1.bf16.msra.mxu0 0
        %2353 = vmatprep.subr.bf16.mxu0 0
        %2354 = vmatpush1.bf16.msra.mxu0 0
        %2355 = vmatprep.subr.bf16.mxu0 0
        %2356 = vmatpush1.bf16.msra.mxu0 0
        %2357 = vmatprep.subr.bf16.mxu0 0
        %2358 = vmatpush1.bf16.msra.mxu0 0
        %2359 = vmatprep.subr.bf16.mxu0 0
        %2360 = vmatpush1.bf16.msra.mxu0 %v2287
        %2361 = vmatprep.subr.bf16.mxu0 0
        %2362 = vmatpush2.bf16.msra.mxu0 0
        %2363 = vmatprep.subr.bf16.mxu0 0
        %2364 = vmatpush2.bf16.msra.mxu0 0
        %2365 = vmatprep.subr.bf16.mxu0 0
        %2366 = vmatpush2.bf16.msra.mxu0 0
        %2367 = vmatprep.subr.bf16.mxu0 0
        %2368 = vmatpush2.bf16.msra.mxu0 0
        %2369 = vmatprep.subr.bf16.mxu0 0
        %2370 = vmatpush2.bf16.msra.mxu0 0
        %2371 = vmatprep.subr.bf16.mxu0 0
        %2372 = vmatpush2.bf16.msra.mxu0 0
        %2373 = vmatprep.subr.bf16.mxu0 0
        %2374 = vmatpush2.bf16.msra.mxu0 0
        %2375 = vmatprep.subr.bf16.mxu0 0
        %2376 = vmatpush2.bf16.msra.mxu0 0
        %2377 = vmatprep.mubr.bf16.mxu0 0
        %2378 = vmatmul.mubr.bf16.gmra.mxu0 %v2277
        %v2379 = vpop.f32.mrf.mxu0
        %v2380 = vadd.f32 %v2324, %v2379
        %v2381 = vpop.f32.mrf.mxu0
        %v2382 = vpop.f32.mrf.mxu0
        %v2383 = vadd.f32 %v2327, %v2382
        %v2384 = vpop.f32.mrf.mxu0
        %2385 = vmatprep.mubr.bf16.mxu0 0
        %2386 = vmatmul.mubr.bf16.gmra.mxu0 %v2280
        %v2387 = vpop.f32.mrf.mxu0
        %v2388 = vadd.f32 %v2332, %v2387
        %v2389 = vpop.f32.mrf.mxu0
        %v2390 = vpop.f32.mrf.mxu0
        %v2391 = vadd.f32 %v2335, %v2390
        %v2392 = vpop.f32.mrf.mxu0
        %2393 = vmatprep.mubr.bf16.mxu0 0
        %2394 = vmatmul.mubr.bf16.gmra.mxu0 %v2283
        %v2395 = vpop.f32.mrf.mxu0
        %v2396 = vadd.f32 %v2340, %v2395
        %v2397 = vpop.f32.mrf.mxu0
        %v2398 = vpop.f32.mrf.mxu0
        %v2399 = vpop.f32.mrf.mxu0
        %2400 = vdwg.mxu0
        %2401 = vst [vmem:[%s234] sm:$0xff] %v2380
        %2402 = vst [vmem:[%s234 + $0x8] sm:$0xff] %v2383
        %2403 = vst [vmem:[%s234 + $0x10] sm:$0xff] %v2388
        %2404 = vst [vmem:[%s234 + $0x18] sm:$0xff] %v2391
        %2405 = vst [vmem:[%s234 + $0x20] sm:$0xff] %v2396
        %s2406 = sand.u32 %s113, 1
        %s2407 = scalar_lea.sflag [#allocation4], %s2406
        %s2408 = sand.u32 %s113, 1
        %s2409 = smul.addr %s2408, 40
        %s2410 = scalar_lea.vmem [#allocation8], %s2409
        // Predicated region
        $region45: #{tpu_custom_call.1} parent=31 // pred_check
          %p2411 = pneg %p123
        $region46: #{tpu_custom_call.1} parent=31 // pred_check_branch
          %2413 = sbr.rel (%p2411) target = $region48
        $region47: #{tpu_custom_call.1} parent=31 // pred_region
          %s2415 = ssub.s32 640, 640
          %2416 = vsyncadd %s2407, %s2415
          %s2417 = smul.addr %s25, 15
          %s2418 = sadd.s32 %s26, %s2417
          %s2419 = smul.addr %s2418, 128
          %s2420 = scalar_lea.hbm %s3, %s2419
          %s2421 = sshll.u32 %s2410, 4
          %s2422 = int_to_ptr.vmem [resolvable:$true] %s2421
          %2427 = dma.vmem_to_hbm [thread:$0]  %s2422, 640, %s2420, %s2407, 128, 384, 8
        $region48: #{tpu_custom_call.1} parent=31 // pred_fallthru
          _
      $region32: #{tpu_custom_call.1} parent=5 // pred_fallthru
        _
      %p2428 = scmp.le.s32.totalorder 2, %s16
      // Predicated region
      $region49: #{tpu_custom_call.1} parent=5 // pred_check
        %p2429 = pneg %p2428
      $region50: #{tpu_custom_call.1} parent=5 // pred_check_branch
        %2431 = sbr.rel (%p2429) target = $region52
      $region51: #{tpu_custom_call.1} parent=5 // pred_region
        %s2432 = ssub.s32 %s16, 2
        // Predicated region
        $region53: #{tpu_custom_call.1} parent=51 // pred_check
          %p2433 = pneg %p129
        $region54: #{tpu_custom_call.1} parent=51 // pred_check_branch
          %2435 = sbr.rel (%p2433) target = $region56
        $region55: #{tpu_custom_call.1} parent=51 // pred_region
          %s2436 = sand.u32 %s114, 1
          %s2437 = scalar_lea.sflag [#allocation4], %s2436
          %s2438 = sand.u32 %s114, 1
          %s2439 = smul.addr %s2438, 40
          %s2440 = scalar_lea.vmem [#allocation8], %s2439
          %2441 = dma.done %s2437, 640
        $region56: #{tpu_custom_call.1} parent=51 // pred_fallthru
          _
      $region52: #{tpu_custom_call.1} parent=5 // pred_fallthru
        _
    $region6: #{tpu_custom_call.1} parent=1 // loop_footer
      %s20 = sadd.s32 1, %s16
    $region7: #{tpu_custom_call.1} parent=1 // loop_footer_branch
      %15 = sbr.rel target = $region3
    $region8: #{tpu_custom_call.1} parent=1 // loop_exit
      _
    %2442 = vsyncpa [#allocation3], 1
    %s2443 = scalar_lea.sflag [#allocation3], 1
    %2444 = vsyncpa %s2443, 1
    %2445 = vsyncpa [#allocation6], 1
    %2446 = vsyncpa [#allocation4], 1
    %s2447 = scalar_lea.sflag [#allocation4], 1
    %2448 = vsyncpa %s2447, 1

</llo_original>
